<compile_context>
chip_gen: v7x
topology: tpu7x:2x2x1
jax: 0.10.0
libtpu: 0.0.40
codegen_flags: <defaults>
</compile_context>

<pallas_src>
import functools

import jax
import jax.numpy as jnp
from jax.experimental import pallas as pl
from jax.experimental.pallas import tpu as pltpu

LN_EPS = 1e-5
LEAK = 0.05  # melDisc_v1.forward calls F.leaky_relu(x, 0.05) explicitly.


def _layer_norm(v, gamma, beta):
    # PyTorch LayerNorm over the channel (last) dim, biased variance.
    mu = jnp.mean(v, axis=-1, keepdims=True)
    var = jnp.mean(jnp.square(v - mu), axis=-1, keepdims=True)
    return (v - mu) * jax.lax.rsqrt(var + LN_EPS) * gamma + beta


def _leaky(v):
    # max-based leaky relu: 2 VALU ops instead of compare+mul+select.
    return jnp.maximum(v, LEAK * v)


def _sigmoid(v):
    # Kernel-only: divide goes to the EUP via approximate reciprocal (VALU is the hot slot).
    return pl.reciprocal(1.0 + jnp.exp(-v), approx=True)


def mel_disc_kernel(T, D,
                    x_ref, w1_ref, whw_ref, w2_ref, w3_ref, w4_ref,
                    vD_ref, v64_ref, v16_ref, v4_ref,
                    out_ref):
    rows = x_ref.shape[0]              # = batch_block * T (batch folded into matmul rows)
    bblk = rows // T
    f32 = jnp.float32
    cdt = w1_ref.dtype                 # matmul-operand dtype (bf16)

    # --- packed per-layer vectors, sliced as (1, C) rows for broadcasting ---
    b1, g1, be1 = vD_ref[0:1, :], vD_ref[1:2, :], vD_ref[2:3, :]
    hb1, hb2 = vD_ref[3:4, :], vD_ref[4:5, :]
    hg1, hbe1 = vD_ref[5:6, :], vD_ref[6:7, :]
    hg2, hbe2 = vD_ref[7:8, :], vD_ref[8:9, :]
    b2, g2, be2 = v64_ref[0:1, :], v64_ref[1:2, :], v64_ref[2:3, :]
    b3, g3, be3 = v16_ref[0:1, :], v16_ref[1:2, :], v16_ref[2:3, :]
    b4, g4, be4 = v4_ref[0:1, :], v4_ref[1:2, :], v4_ref[2:3, :]
    w5 = v4_ref[3:4, :]                # conv5 weight as a (1, 4) row (f32)
    b5 = v4_ref[4:5, 0:1]              # conv5 bias as (1, 1)

    x = x_ref[...].astype(cdt)                                         # (rows, F) bf16
    r_id = jax.lax.broadcasted_iota(jnp.int32, (rows, 1), 0)
    t_id = r_id % T                    # time index inside each folded batch element

    # ---- conv1 (1x1) + ln1  (dp1 dropout = identity, eval mode) ----
    # TODO(synk): all Dropout(p=0.05) layers are implemented as identity (eval mode).
    h = jnp.dot(x, w1_ref[...], preferred_element_type=f32) + b1
    h = _layer_norm(h, g1, be1)                                        # (rows, D) f32

    # ---- highwayConv: k=3 "same" conv as THREE accumulated (rows,D)@(D,2D) matmuls ----
    # Time shifts via XLU rolls on the f32 activations; rows that would bleed across batch
    # boundaries are zeroed, matching the PyTorch Conv1d(padding=1) per-sample zero padding.
    h_prev = jnp.where(t_id == 0, 0.0, pltpu.roll(h, shift=1, axis=0)).astype(cdt)         # h[t-1]
    h_mid = h.astype(cdt)
    h_next = jnp.where(t_id == T - 1, 0.0, pltpu.roll(h, shift=rows - 1, axis=0)).astype(cdt)  # h[t+1]
    HW = (jnp.dot(h_prev, whw_ref[0], preferred_element_type=f32)
          + jnp.dot(h_mid, whw_ref[1], preferred_element_type=f32)
          + jnp.dot(h_next, whw_ref[2], preferred_element_type=f32))   # (rows, 2D) f32
    H1 = _layer_norm(HW[:, :D] + hb1, hg1, hbe1)
    H2 = _layer_norm(HW[:, D:2 * D] + hb2, hg2, hbe2)
    sig = _sigmoid(H1)
    h = sig * H2 + (1.0 - sig) * h     # highway gate (hc.dp dropout = identity)

    # ---- conv2 (1x1) -> AvgPool1d(2) over time -> ln2 -> leaky  (dp2 = identity) ----
    y = jnp.dot(h.astype(cdt), w2_ref[...], preferred_element_type=f32) + b2   # (rows, 64)
    # Average each (even, odd) time pair; the pooled value is kept duplicated on both rows of
    # the pair (exact: the final per-batch time mean simply counts each pooled frame twice).
    nxt = pltpu.roll(y, shift=rows - 1, axis=0)    # row r -> y[r+1]
    prv = pltpu.roll(y, shift=1, axis=0)           # row r -> y[r-1]
    y = 0.5 * (y + jnp.where(r_id % 2 == 0, nxt, prv))
    y = _leaky(_layer_norm(y, g2, be2))

    # ---- conv3 (1x1) -> ln3 ----
    y = jnp.dot(y.astype(cdt), w3_ref[...], preferred_element_type=f32) + b3
    y = _layer_norm(y, g3, be3)

    # ---- conv4(leaky(.)) -> ln4 ----
    # TODO(synk): melDisc_v1 declares conv4 = Conv1d(8, 4) but feeds it the 16-channel
    # conv3/ln3 output (a shape error in PyTorch); implemented as Conv1d(16, 4) so that
    # ln4 = LayerNorm(4) and conv5 = Conv1d(4, 1) stay consistent.
    y = jnp.dot(_leaky(y).astype(cdt), w4_ref[...], preferred_element_type=f32) + b4
    y = _layer_norm(y, g4, be4)                                        # (rows, 4) f32

    # ---- conv5(leaky(.)) -> AdaptiveAvgPool1d(1) -> sigmoid, per batch element ----
    # conv5 is linear, so mean(conv5(u)) == conv5(mean(u)); one lane reduce then a LINEAR-cost
    # per-segment sublane sum (unrolled over the batch_block segments of T contiguous rows).
    z = jnp.sum(_leaky(y) * w5, axis=-1, keepdims=True)                # (rows, 1)
    parts = [jnp.sum(z[b * T:(b + 1) * T, :], axis=0, keepdims=True)   # (1, 1) each
             for b in range(bblk)]
    zb = parts[0] if bblk == 1 else jnp.concatenate(parts, axis=1)     # (1, bblk)
    # Each pooled frame appears twice among the T rows of a batch element -> /T == mean over T/2.
    mean = zb * (1.0 / T) + b5
    out_ref[...] = jnp.reshape(_sigmoid(mean), (1, 1, bblk))


def _round_up(n, m):
    return (n + m - 1) // m * m


def _default_batch_block(B, T, target_rows):
    """Largest divisor of B with batch_block*T <= target_rows and B/batch_block >= 2 (if B>=2)."""
    best = 1
    for bb in range(1, B + 1):
        if B % bb:
            continue
        if bb > 1 and bb * T > target_rows:
            continue
        if B >= 2 and B // bb < 2:
            continue
        best = bb
    return best


def mel_disc_forward(x_nct, params, *, batch_block=None, target_rows=2048):
    """melDisc_v1 forward.  x_nct: (B, freq_bins, T) in PyTorch Conv1d layout -> (B, 1, 1)."""
    B, F, T = x_nct.shape
    D = params["w1"].shape[1]
    # TODO(synk): PyTorch AvgPool1d(2) silently drops an odd trailing frame; only even T here.
    assert T % 2 == 0, "T must be even (AvgPool1d(2))"
    if batch_block is None:
        batch_block = _default_batch_block(B, T, target_rows)
    assert B % batch_block == 0, "B must be divisible by batch_block"
    rows = batch_block * T
    assert rows % 8 == 0, "batch_block * T must be a multiple of 8 (TPU sublane tiling)"
    nb = B // batch_block

    # bf16 input block needs a 16-row-aligned block; otherwise keep x f32 and cast in-kernel.
    use_bf16_x = (rows % 16 == 0)
    x_dtype = jnp.bfloat16 if use_bf16_x else jnp.float32

    # Channels-last with batch folded into the row (sublane) axis: (B*T, freq_bins).
    # TODO(synk): this XLA-side transpose is one extra HBM pass over x; reading (bblk, F, T)
    # blocks and contracting F in-kernel avoids it but risks an in-kernel relayout, so it is
    # deliberately kept outside the kernel.
    x = jnp.transpose(x_nct, (0, 2, 1)).astype(x_dtype).reshape(B * T, F)

    wdt = jnp.bfloat16  # matmul weights in bf16 on all generations (f32 MXU accumulation)
    weights = [params["w1"].astype(wdt), params["whw3"].astype(wdt), params["w2"].astype(wdt),
               params["w3"].astype(wdt), params["w4"].astype(wdt),
               params["vD"], params["v64"], params["v16"], params["v4"]]

    def wspec(a):
        zeros = (0,) * a.ndim
        return pl.BlockSpec(a.shape, lambda i: zeros)   # constant block -> fetched once

    in_specs = [pl.BlockSpec((rows, F), lambda i: (i, 0))] + [wspec(a) for a in weights]
    out_spec = pl.BlockSpec((1, 1, batch_block), lambda i: (i, 0, 0))

    # Explicit scoped-VMEM budget: double-buffered input block + ~14 live lane-padded f32
    # working slabs per row + weights/slack.  Covers v5e's 16 MiB default and stays within
    # v7x's 64 MiB physical VMEM at the default rows target.
    fpad = _round_up(F, 128)
    x_bytes = 2 if use_bf16_x else 4
    vmem_est = 2 * rows * fpad * x_bytes + 14 * rows * 128 * 4 + (4 << 20)
    vmem_limit = int(min(64 << 20, max(32 << 20, vmem_est)))

    out = pl.pallas_call(
        functools.partial(mel_disc_kernel, T, D),
        out_shape=jax.ShapeDtypeStruct((nb, 1, batch_block), jnp.float32),
        grid_spec=pltpu.PrefetchScalarGridSpec(
            num_scalar_prefetch=0,
            grid=(nb,),
            in_specs=in_specs,
            out_specs=out_spec,
        ),
        compiler_params=pltpu.CompilerParams(
            dimension_semantics=("parallel",),
            vmem_limit_bytes=vmem_limit,
        ),
    )(x, *weights)
    return out.reshape(B, 1, 1)


def init_params(key, freq_bins, disc_dim):
    """Parameters in the fused / packed layout the kernel consumes.

    Mapping from the PyTorch module:
      w1   (F, D)      = conv1.weight[:, :, 0].T
      whw3 (3, D, 2D)  : whw3[k, c, o] = hc.conv.weight[o, c, k]  (one (D,2D) tile per tap)
      w2 (D, 64), w3 (64, 16), w4 (16, 4) = convN.weight[:, :, 0].T
      vD  (9, D)   = [conv1.b, ln1.g, ln1.b, hc.conv.b[:D], hc.conv.b[D:],
                      hc.ln1.g, hc.ln1.b, hc.ln2.g, hc.ln2.b]
      v64 (3, 64)  = [conv2.b, ln2.g, ln2.b]
      v16 (3, 16)  = [conv3.b, ln3.g, ln3.b]
      v4  (5, 4)   = [conv4.b, ln4.g, ln4.b, conv5.weight[0, :, 0], pad(conv5.b)]
    """
    D = disc_dim
    keys = iter(jax.random.split(key, 32))

    def nrm(shape, scale=0.1):
        return scale * jax.random.normal(next(keys), shape, dtype=jnp.float32)

    def gamma(width):
        return 1.0 + 0.05 * jax.random.normal(next(keys), (width,), dtype=jnp.float32)

    def beta(width):
        return 0.05 * jax.random.normal(next(keys), (width,), dtype=jnp.float32)

    p = {}
    p["w1"] = nrm((freq_bins, D))
    p["whw3"] = nrm((3, D, 2 * D))
    p["w2"] = nrm((D, 64))
    p["w3"] = nrm((64, 16))
    # TODO(synk): conv4 declared Conv1d(8, 4) in melDisc_v1 but its input has 16 channels;
    # implemented as Conv1d(16, 4).
    p["w4"] = nrm((16, 4))
    p["vD"] = jnp.stack([nrm((D,)), gamma(D), beta(D), nrm((D,)), nrm((D,)),
                         gamma(D), beta(D), gamma(D), beta(D)])
    p["v64"] = jnp.stack([nrm((64,)), gamma(64), beta(64)])
    p["v16"] = jnp.stack([nrm((16,)), gamma(16), beta(16)])
    p["v4"] = jnp.stack([nrm((4,)), gamma(4), beta(4), nrm((4,)),
                         jnp.pad(nrm((1,)), (0, 3))])
    return p


def reference_forward(x_nct, p):
    """Pure-JAX f32 mirror of melDisc_v1.forward (eval mode), for validation."""
    D = p["w1"].shape[1]
    vD, v64, v16, v4 = p["vD"], p["v64"], p["v16"], p["v4"]
    x = jnp.transpose(x_nct, (0, 2, 1)).astype(jnp.float32)            # (B, T, F)
    B = x.shape[0]

    h = x @ p["w1"] + vD[0]
    h = _layer_norm(h, vD[1], vD[2])
    hp = jnp.pad(h, ((0, 0), (1, 1), (0, 0)))
    HW = (hp[:, :-2] @ p["whw3"][0] + hp[:, 1:-1] @ p["whw3"][1] + hp[:, 2:] @ p["whw3"][2])
    H1 = _layer_norm(HW[..., :D] + vD[3], vD[5], vD[6])
    H2 = _layer_norm(HW[..., D:] + vD[4], vD[7], vD[8])
    sig = jax.nn.sigmoid(H1)
    h = sig * H2 + (1.0 - sig) * h
    y = h @ p["w2"] + v64[0]
    y = 0.5 * (y[:, 0::2] + y[:, 1::2])                                # AvgPool1d(2)
    y = _leaky(_layer_norm(y, v64[1], v64[2]))
    y = _layer_norm(y @ p["w3"] + v16[0], v16[1], v16[2])
    y = _layer_norm(_leaky(y) @ p["w4"] + v4[0], v4[1], v4[2])
    z = jnp.sum(_leaky(y) * v4[3], axis=-1) + v4[4, 0]                 # conv5, (B, T//2)
    return jax.nn.sigmoid(jnp.mean(z, axis=-1)).reshape(B, 1, 1)


if __name__ == "__main__":
    B, FREQ_BINS, DISC_DIM, T = 4, 32, 32, 16
    key = jax.random.PRNGKey(0)
    kx, kp = jax.random.split(key)
    x = jax.random.normal(kx, (B, FREQ_BINS, T), dtype=jnp.float32)    # PyTorch (B, C, T)
    params = init_params(kp, FREQ_BINS, DISC_DIM)

    out = mel_disc_forward(x, params)   # default heuristic: batch_block=2, nb=2
    jax.block_until_ready(out)
    assert out.shape == (B, 1, 1), out.shape
    assert bool(jnp.all(jnp.isfinite(out)))

    # Tolerance covers bf16 matmul operands + approx-reciprocal sigmoid vs the pure-f32 reference.
    ref = reference_forward(x, params)
    assert bool(jnp.allclose(out, ref, atol=2e-2, rtol=2e-2)), (out.ravel(), ref.ravel())
    print("KERNEL_OK")
</pallas_src>

<mosaic_0001>
module attributes {stable_mosaic.version = 11 : i64} {
  func.func @mel_disc_kernel(%arg0: i32, %arg1: memref<32x32xbf16, #tpu.memory_space<vmem>>, %arg2: memref<32x32xbf16, #tpu.memory_space<vmem>>, %arg3: memref<3x32x64xbf16, #tpu.memory_space<vmem>>, %arg4: memref<32x64xbf16, #tpu.memory_space<vmem>>, %arg5: memref<64x16xbf16, #tpu.memory_space<vmem>>, %arg6: memref<16x4xbf16, #tpu.memory_space<vmem>>, %arg7: memref<9x32xf32, #tpu.memory_space<vmem>>, %arg8: memref<3x64xf32, #tpu.memory_space<vmem>>, %arg9: memref<3x16xf32, #tpu.memory_space<vmem>>, %arg10: memref<5x4xf32, #tpu.memory_space<vmem>>, %arg11: memref<1x1x2xf32, #tpu.memory_space<vmem>>) attributes {dimension_semantics = [#tpu.dimension_semantics<parallel>], iteration_bounds = array<i64: 2>, scalar_prefetch = 0 : i64, scratch_operands = 0 : i64, tpu.core_type = #tpu.core_type<tc>, window_params = [{transform_indices = @transform_0, window_bounds = array<i64: 32, 32>}, {pipeline_mode = #tpu.pipeline_mode<synchronous>, transform_indices = @transform_1, window_bounds = array<i64: 32, 32>}, {pipeline_mode = #tpu.pipeline_mode<synchronous>, transform_indices = @transform_2, window_bounds = array<i64: 3, 32, 64>}, {pipeline_mode = #tpu.pipeline_mode<synchronous>, transform_indices = @transform_3, window_bounds = array<i64: 32, 64>}, {pipeline_mode = #tpu.pipeline_mode<synchronous>, transform_indices = @transform_4, window_bounds = array<i64: 64, 16>}, {pipeline_mode = #tpu.pipeline_mode<synchronous>, transform_indices = @transform_5, window_bounds = array<i64: 16, 4>}, {pipeline_mode = #tpu.pipeline_mode<synchronous>, transform_indices = @transform_6, window_bounds = array<i64: 9, 32>}, {pipeline_mode = #tpu.pipeline_mode<synchronous>, transform_indices = @transform_7, window_bounds = array<i64: 3, 64>}, {pipeline_mode = #tpu.pipeline_mode<synchronous>, transform_indices = @transform_8, window_bounds = array<i64: 3, 16>}, {pipeline_mode = #tpu.pipeline_mode<synchronous>, transform_indices = @transform_9, window_bounds = array<i64: 5, 4>}, {transform_indices = @transform_10, window_bounds = array<i64: 1, 1, 2>}]} {
    %c0 = arith.constant 0 : index
    %c0_0 = arith.constant 0 : index
    %0 = vector.load %arg7[%c0, %c0_0] : memref<9x32xf32, #tpu.memory_space<vmem>>, vector<1x32xf32>
    %c1 = arith.constant 1 : index
    %c0_1 = arith.constant 0 : index
    %1 = vector.load %arg7[%c1, %c0_1] : memref<9x32xf32, #tpu.memory_space<vmem>>, vector<1x32xf32>
    %c2 = arith.constant 2 : index
    %c0_2 = arith.constant 0 : index
    %2 = vector.load %arg7[%c2, %c0_2] : memref<9x32xf32, #tpu.memory_space<vmem>>, vector<1x32xf32>
    %c3 = arith.constant 3 : index
    %c0_3 = arith.constant 0 : index
    %3 = vector.load %arg7[%c3, %c0_3] : memref<9x32xf32, #tpu.memory_space<vmem>>, vector<1x32xf32>
    %c4 = arith.constant 4 : index
    %c0_4 = arith.constant 0 : index
    %4 = vector.load %arg7[%c4, %c0_4] : memref<9x32xf32, #tpu.memory_space<vmem>>, vector<1x32xf32>
    %c5 = arith.constant 5 : index
    %c0_5 = arith.constant 0 : index
    %5 = vector.load %arg7[%c5, %c0_5] : memref<9x32xf32, #tpu.memory_space<vmem>>, vector<1x32xf32>
    %c6 = arith.constant 6 : index
    %c0_6 = arith.constant 0 : index
    %6 = vector.load %arg7[%c6, %c0_6] : memref<9x32xf32, #tpu.memory_space<vmem>>, vector<1x32xf32>
    %c7 = arith.constant 7 : index
    %c0_7 = arith.constant 0 : index
    %7 = vector.load %arg7[%c7, %c0_7] : memref<9x32xf32, #tpu.memory_space<vmem>>, vector<1x32xf32>
    %c8 = arith.constant 8 : index
    %c0_8 = arith.constant 0 : index
    %8 = vector.load %arg7[%c8, %c0_8] : memref<9x32xf32, #tpu.memory_space<vmem>>, vector<1x32xf32>
    %c0_9 = arith.constant 0 : index
    %c0_10 = arith.constant 0 : index
    %9 = vector.load %arg8[%c0_9, %c0_10] : memref<3x64xf32, #tpu.memory_space<vmem>>, vector<1x64xf32>
    %c1_11 = arith.constant 1 : index
    %c0_12 = arith.constant 0 : index
    %10 = vector.load %arg8[%c1_11, %c0_12] : memref<3x64xf32, #tpu.memory_space<vmem>>, vector<1x64xf32>
    %c2_13 = arith.constant 2 : index
    %c0_14 = arith.constant 0 : index
    %11 = vector.load %arg8[%c2_13, %c0_14] : memref<3x64xf32, #tpu.memory_space<vmem>>, vector<1x64xf32>
    %c0_15 = arith.constant 0 : index
    %c0_16 = arith.constant 0 : index
    %12 = vector.load %arg9[%c0_15, %c0_16] : memref<3x16xf32, #tpu.memory_space<vmem>>, vector<1x16xf32>
    %c1_17 = arith.constant 1 : index
    %c0_18 = arith.constant 0 : index
    %13 = vector.load %arg9[%c1_17, %c0_18] : memref<3x16xf32, #tpu.memory_space<vmem>>, vector<1x16xf32>
    %c2_19 = arith.constant 2 : index
    %c0_20 = arith.constant 0 : index
    %14 = vector.load %arg9[%c2_19, %c0_20] : memref<3x16xf32, #tpu.memory_space<vmem>>, vector<1x16xf32>
    %c0_21 = arith.constant 0 : index
    %c0_22 = arith.constant 0 : index
    %15 = vector.load %arg10[%c0_21, %c0_22] : memref<5x4xf32, #tpu.memory_space<vmem>>, vector<1x4xf32>
    %c1_23 = arith.constant 1 : index
    %c0_24 = arith.constant 0 : index
    %16 = vector.load %arg10[%c1_23, %c0_24] : memref<5x4xf32, #tpu.memory_space<vmem>>, vector<1x4xf32>
    %c2_25 = arith.constant 2 : index
    %c0_26 = arith.constant 0 : index
    %17 = vector.load %arg10[%c2_25, %c0_26] : memref<5x4xf32, #tpu.memory_space<vmem>>, vector<1x4xf32>
    %c3_27 = arith.constant 3 : index
    %c0_28 = arith.constant 0 : index
    %18 = vector.load %arg10[%c3_27, %c0_28] : memref<5x4xf32, #tpu.memory_space<vmem>>, vector<1x4xf32>
    %c4_29 = arith.constant 4 : index
    %c0_30 = arith.constant 0 : index
    %19 = vector.load %arg10[%c4_29, %c0_30] : memref<5x4xf32, #tpu.memory_space<vmem>>, vector<1x1xf32>
    %c0_31 = arith.constant 0 : index
    %c0_32 = arith.constant 0 : index
    %20 = vector.load %arg1[%c0_31, %c0_32] : memref<32x32xbf16, #tpu.memory_space<vmem>>, vector<32x32xbf16>
    %21 = tpu.iota {dimensions = array<i32: 0>} : vector<32x1xi32>
    %c16_i32 = arith.constant 16 : i32
    %c0_i32 = arith.constant 0 : i32
    %22 = arith.cmpi eq, %c16_i32, %c0_i32 : i32
    %c1_i32 = arith.constant 1 : i32
    %23 = arith.select %22, %c1_i32, %c16_i32 : i32
    %24 = vector.broadcast %23 : i32 to vector<32x1xi32>
    %25 = arith.remsi %21, %24 : vector<32x1xi32>
    %c0_i32_33 = arith.constant 0 : i32
    %26 = vector.broadcast %c0_i32_33 : i32 to vector<32x1xi32>
    %27 = arith.cmpi ne, %25, %26 : vector<32x1xi32>
    %c0_i32_34 = arith.constant 0 : i32
    %28 = vector.broadcast %c0_i32_34 : i32 to vector<32x1xi32>
    %29 = arith.cmpi slt, %25, %28 : vector<32x1xi32>
    %c0_i32_35 = arith.constant 0 : i32
    %30 = arith.cmpi slt, %23, %c0_i32_35 : i32
    %31 = vector.broadcast %30 : i1 to vector<32x1xi1>
    %32 = vector.broadcast %31 : vector<32x1xi1> to vector<32x1xi1>
    %33 = arith.xori %29, %32 : vector<32x1xi1>
    %34 = arith.andi %33, %27 : vector<32x1xi1>
    %35 = vector.broadcast %23 : i32 to vector<32x1xi32>
    %36 = arith.addi %25, %35 : vector<32x1xi32>
    %37 = arith.select %34, %36, %25 : vector<32x1xi1>, vector<32x1xi32>
    %c0_36 = arith.constant 0 : index
    %c0_37 = arith.constant 0 : index
    %38 = vector.load %arg2[%c0_36, %c0_37] : memref<32x32xbf16, #tpu.memory_space<vmem>>, vector<32x32xbf16>
    %cst = arith.constant dense<0.000000e+00> : vector<32x32xf32>
    %39 = tpu.matmul %20, %38, %cst {dimension_numbers = #tpu.dot_dimension_numbers<[1], [0], [0], [1], [0, 0, 1, 1], [], []>} : vector<32x32xbf16>, vector<32x32xbf16>, vector<32x32xf32> -> vector<32x32xf32>
    %40 = vector.broadcast %0 : vector<1x32xf32> to vector<32x32xf32>
    %41 = arith.addf %39, %40 : vector<32x32xf32>
    %cst_38 = arith.constant dense<0.000000e+00> : vector<32xf32>
    %42 = vector.multi_reduction <add>, %41, %cst_38 [1] : vector<32x32xf32> to vector<32xf32>
    %43 = vector.shape_cast %42 : vector<32xf32> to vector<32x1xf32>
    %cst_39 = arith.constant 3.200000e+01 : f32
    %44 = vector.broadcast %cst_39 : f32 to vector<32x1xf32>
    %45 = arith.divf %43, %44 : vector<32x1xf32>
    %46 = vector.broadcast %45 : vector<32x1xf32> to vector<32x32xf32>
    %47 = arith.subf %41, %46 : vector<32x32xf32>
    %48 = arith.mulf %47, %47 : vector<32x32xf32>
    %cst_40 = arith.constant dense<0.000000e+00> : vector<32xf32>
    %49 = vector.multi_reduction <add>, %48, %cst_40 [1] : vector<32x32xf32> to vector<32xf32>
    %50 = vector.shape_cast %49 : vector<32xf32> to vector<32x1xf32>
    %cst_41 = arith.constant 3.200000e+01 : f32
    %51 = vector.broadcast %cst_41 : f32 to vector<32x1xf32>
    %52 = arith.divf %50, %51 : vector<32x1xf32>
    %53 = vector.broadcast %45 : vector<32x1xf32> to vector<32x32xf32>
    %54 = arith.subf %41, %53 : vector<32x32xf32>
    %cst_42 = arith.constant 9.99999974E-6 : f32
    %55 = vector.broadcast %cst_42 : f32 to vector<32x1xf32>
    %56 = arith.addf %52, %55 : vector<32x1xf32>
    %57 = math.rsqrt %56 : vector<32x1xf32>
    %58 = vector.broadcast %57 : vector<32x1xf32> to vector<32x32xf32>
    %59 = arith.mulf %54, %58 : vector<32x32xf32>
    %60 = vector.broadcast %1 : vector<1x32xf32> to vector<32x32xf32>
    %61 = arith.mulf %59, %60 : vector<32x32xf32>
    %62 = vector.broadcast %2 : vector<1x32xf32> to vector<32x32xf32>
    %63 = arith.addf %61, %62 : vector<32x32xf32>
    %c0_i32_43 = arith.constant 0 : i32
    %64 = vector.broadcast %c0_i32_43 : i32 to vector<32x1xi32>
    %65 = arith.cmpi eq, %37, %64 : vector<32x1xi32>
    %c1_i32_44 = arith.constant 1 : i32
    %66 = tpu.dynamic_rotate %63 by %c1_i32_44 dim 0 : vector<32x32xf32>, i32 -> vector<32x32xf32>
    %cst_45 = arith.constant 0.000000e+00 : f32
    %67 = vector.shape_cast %65 : vector<32x1xi1> to vector<32x1xi1>
    %68 = vector.broadcast %67 : vector<32x1xi1> to vector<32x32xi1>
    %69 = vector.broadcast %cst_45 : f32 to vector<32x32xf32>
    %70 = arith.select %68, %69, %66 : vector<32x32xi1>, vector<32x32xf32>
    %71 = arith.truncf %70 : vector<32x32xf32> to vector<32x32xbf16>
    %72 = arith.truncf %63 : vector<32x32xf32> to vector<32x32xbf16>
    %c15_i32 = arith.constant 15 : i32
    %73 = vector.broadcast %c15_i32 : i32 to vector<32x1xi32>
    %74 = arith.cmpi eq, %37, %73 : vector<32x1xi32>
    %c31_i32 = arith.constant 31 : i32
    %75 = tpu.dynamic_rotate %63 by %c31_i32 dim 0 : vector<32x32xf32>, i32 -> vector<32x32xf32>
    %cst_46 = arith.constant 0.000000e+00 : f32
    %76 = vector.shape_cast %74 : vector<32x1xi1> to vector<32x1xi1>
    %77 = vector.broadcast %76 : vector<32x1xi1> to vector<32x32xi1>
    %78 = vector.broadcast %cst_46 : f32 to vector<32x32xf32>
    %79 = arith.select %77, %78, %75 : vector<32x32xi1>, vector<32x32xf32>
    %80 = arith.truncf %79 : vector<32x32xf32> to vector<32x32xbf16>
    %c0_47 = arith.constant 0 : index
    %c0_48 = arith.constant 0 : index
    %c0_49 = arith.constant 0 : index
    %81 = vector.load %arg3[%c0_47, %c0_48, %c0_49] : memref<3x32x64xbf16, #tpu.memory_space<vmem>>, vector<1x32x64xbf16>
    %82 = vector.shape_cast %81 : vector<1x32x64xbf16> to vector<32x64xbf16>
    %cst_50 = arith.constant dense<0.000000e+00> : vector<32x64xf32>
    %83 = tpu.matmul %71, %82, %cst_50 {dimension_numbers = #tpu.dot_dimension_numbers<[1], [0], [0], [1], [0, 0, 1, 1], [], []>} : vector<32x32xbf16>, vector<32x64xbf16>, vector<32x64xf32> -> vector<32x64xf32>
    %c1_51 = arith.constant 1 : index
    %c0_52 = arith.constant 0 : index
    %c0_53 = arith.constant 0 : index
    %84 = vector.load %arg3[%c1_51, %c0_52, %c0_53] : memref<3x32x64xbf16, #tpu.memory_space<vmem>>, vector<1x32x64xbf16>
    %85 = vector.shape_cast %84 : vector<1x32x64xbf16> to vector<32x64xbf16>
    %cst_54 = arith.constant dense<0.000000e+00> : vector<32x64xf32>
    %86 = tpu.matmul %72, %85, %cst_54 {dimension_numbers = #tpu.dot_dimension_numbers<[1], [0], [0], [1], [0, 0, 1, 1], [], []>} : vector<32x32xbf16>, vector<32x64xbf16>, vector<32x64xf32> -> vector<32x64xf32>
    %87 = arith.addf %83, %86 : vector<32x64xf32>
    %c2_55 = arith.constant 2 : index
    %c0_56 = arith.constant 0 : index
    %c0_57 = arith.constant 0 : index
    %88 = vector.load %arg3[%c2_55, %c0_56, %c0_57] : memref<3x32x64xbf16, #tpu.memory_space<vmem>>, vector<1x32x64xbf16>
    %89 = vector.shape_cast %88 : vector<1x32x64xbf16> to vector<32x64xbf16>
    %cst_58 = arith.constant dense<0.000000e+00> : vector<32x64xf32>
    %90 = tpu.matmul %80, %89, %cst_58 {dimension_numbers = #tpu.dot_dimension_numbers<[1], [0], [0], [1], [0, 0, 1, 1], [], []>} : vector<32x32xbf16>, vector<32x64xbf16>, vector<32x64xf32> -> vector<32x64xf32>
    %91 = arith.addf %87, %90 : vector<32x64xf32>
    %92 = vector.extract_strided_slice %91 {offsets = [0, 0], sizes = [32, 32], strides = [1, 1]} : vector<32x64xf32> to vector<32x32xf32>
    %93 = vector.broadcast %3 : vector<1x32xf32> to vector<32x32xf32>
    %94 = arith.addf %92, %93 : vector<32x32xf32>
    %cst_59 = arith.constant dense<0.000000e+00> : vector<32xf32>
    %95 = vector.multi_reduction <add>, %94, %cst_59 [1] : vector<32x32xf32> to vector<32xf32>
    %96 = vector.shape_cast %95 : vector<32xf32> to vector<32x1xf32>
    %cst_60 = arith.constant 3.200000e+01 : f32
    %97 = vector.broadcast %cst_60 : f32 to vector<32x1xf32>
    %98 = arith.divf %96, %97 : vector<32x1xf32>
    %99 = vector.broadcast %98 : vector<32x1xf32> to vector<32x32xf32>
    %100 = arith.subf %94, %99 : vector<32x32xf32>
    %101 = arith.mulf %100, %100 : vector<32x32xf32>
    %cst_61 = arith.constant dense<0.000000e+00> : vector<32xf32>
    %102 = vector.multi_reduction <add>, %101, %cst_61 [1] : vector<32x32xf32> to vector<32xf32>
    %103 = vector.shape_cast %102 : vector<32xf32> to vector<32x1xf32>
    %cst_62 = arith.constant 3.200000e+01 : f32
    %104 = vector.broadcast %cst_62 : f32 to vector<32x1xf32>
    %105 = arith.divf %103, %104 : vector<32x1xf32>
    %106 = vector.broadcast %98 : vector<32x1xf32> to vector<32x32xf32>
    %107 = arith.subf %94, %106 : vector<32x32xf32>
    %cst_63 = arith.constant 9.99999974E-6 : f32
    %108 = vector.broadcast %cst_63 : f32 to vector<32x1xf32>
    %109 = arith.addf %105, %108 : vector<32x1xf32>
    %110 = math.rsqrt %109 : vector<32x1xf32>
    %111 = vector.broadcast %110 : vector<32x1xf32> to vector<32x32xf32>
    %112 = arith.mulf %107, %111 : vector<32x32xf32>
    %113 = vector.broadcast %5 : vector<1x32xf32> to vector<32x32xf32>
    %114 = arith.mulf %112, %113 : vector<32x32xf32>
    %115 = vector.broadcast %6 : vector<1x32xf32> to vector<32x32xf32>
    %116 = arith.addf %114, %115 : vector<32x32xf32>
    %117 = vector.extract_strided_slice %91 {offsets = [0, 32], sizes = [32, 32], strides = [1, 1]} : vector<32x64xf32> to vector<32x32xf32>
    %118 = vector.broadcast %4 : vector<1x32xf32> to vector<32x32xf32>
    %119 = arith.addf %117, %118 : vector<32x32xf32>
    %cst_64 = arith.constant dense<0.000000e+00> : vector<32xf32>
    %120 = vector.multi_reduction <add>, %119, %cst_64 [1] : vector<32x32xf32> to vector<32xf32>
    %121 = vector.shape_cast %120 : vector<32xf32> to vector<32x1xf32>
    %cst_65 = arith.constant 3.200000e+01 : f32
    %122 = vector.broadcast %cst_65 : f32 to vector<32x1xf32>
    %123 = arith.divf %121, %122 : vector<32x1xf32>
    %124 = vector.broadcast %123 : vector<32x1xf32> to vector<32x32xf32>
    %125 = arith.subf %119, %124 : vector<32x32xf32>
    %126 = arith.mulf %125, %125 : vector<32x32xf32>
    %cst_66 = arith.constant dense<0.000000e+00> : vector<32xf32>
    %127 = vector.multi_reduction <add>, %126, %cst_66 [1] : vector<32x32xf32> to vector<32xf32>
    %128 = vector.shape_cast %127 : vector<32xf32> to vector<32x1xf32>
    %cst_67 = arith.constant 3.200000e+01 : f32
    %129 = vector.broadcast %cst_67 : f32 to vector<32x1xf32>
    %130 = arith.divf %128, %129 : vector<32x1xf32>
    %131 = vector.broadcast %123 : vector<32x1xf32> to vector<32x32xf32>
    %132 = arith.subf %119, %131 : vector<32x32xf32>
    %cst_68 = arith.constant 9.99999974E-6 : f32
    %133 = vector.broadcast %cst_68 : f32 to vector<32x1xf32>
    %134 = arith.addf %130, %133 : vector<32x1xf32>
    %135 = math.rsqrt %134 : vector<32x1xf32>
    %136 = vector.broadcast %135 : vector<32x1xf32> to vector<32x32xf32>
    %137 = arith.mulf %132, %136 : vector<32x32xf32>
    %138 = vector.broadcast %7 : vector<1x32xf32> to vector<32x32xf32>
    %139 = arith.mulf %137, %138 : vector<32x32xf32>
    %140 = vector.broadcast %8 : vector<1x32xf32> to vector<32x32xf32>
    %141 = arith.addf %139, %140 : vector<32x32xf32>
    %cst_69 = arith.constant 0.000000e+00 : f32
    %142 = vector.broadcast %cst_69 : f32 to vector<32x32xf32>
    %143 = arith.subf %142, %116 : vector<32x32xf32>
    %144 = math.exp %143 : vector<32x32xf32>
    %cst_70 = arith.constant 1.000000e+00 : f32
    %145 = vector.broadcast %cst_70 : f32 to vector<32x32xf32>
    %146 = arith.addf %145, %144 : vector<32x32xf32>
    %147 = tpu.reciprocal %146 {approx = true} : vector<32x32xf32> -> vector<32x32xf32>
    %148 = arith.mulf %147, %141 : vector<32x32xf32>
    %cst_71 = arith.constant 1.000000e+00 : f32
    %149 = vector.broadcast %cst_71 : f32 to vector<32x32xf32>
    %150 = arith.subf %149, %147 : vector<32x32xf32>
    %151 = arith.mulf %150, %63 : vector<32x32xf32>
    %152 = arith.addf %148, %151 : vector<32x32xf32>
    %153 = arith.truncf %152 : vector<32x32xf32> to vector<32x32xbf16>
    %c0_72 = arith.constant 0 : index
    %c0_73 = arith.constant 0 : index
    %154 = vector.load %arg4[%c0_72, %c0_73] : memref<32x64xbf16, #tpu.memory_space<vmem>>, vector<32x64xbf16>
    %cst_74 = arith.constant dense<0.000000e+00> : vector<32x64xf32>
    %155 = tpu.matmul %153, %154, %cst_74 {dimension_numbers = #tpu.dot_dimension_numbers<[1], [0], [0], [1], [0, 0, 1, 1], [], []>} : vector<32x32xbf16>, vector<32x64xbf16>, vector<32x64xf32> -> vector<32x64xf32>
    %156 = vector.broadcast %9 : vector<1x64xf32> to vector<32x64xf32>
    %157 = arith.addf %155, %156 : vector<32x64xf32>
    %c31_i32_75 = arith.constant 31 : i32
    %158 = tpu.dynamic_rotate %157 by %c31_i32_75 dim 0 : vector<32x64xf32>, i32 -> vector<32x64xf32>
    %c1_i32_76 = arith.constant 1 : i32
    %159 = tpu.dynamic_rotate %157 by %c1_i32_76 dim 0 : vector<32x64xf32>, i32 -> vector<32x64xf32>
    %c2_i32 = arith.constant 2 : i32
    %c0_i32_77 = arith.constant 0 : i32
    %160 = arith.cmpi eq, %c2_i32, %c0_i32_77 : i32
    %c1_i32_78 = arith.constant 1 : i32
    %161 = arith.select %160, %c1_i32_78, %c2_i32 : i32
    %162 = vector.broadcast %161 : i32 to vector<32x1xi32>
    %163 = arith.remsi %21, %162 : vector<32x1xi32>
    %c0_i32_79 = arith.constant 0 : i32
    %164 = vector.broadcast %c0_i32_79 : i32 to vector<32x1xi32>
    %165 = arith.cmpi ne, %163, %164 : vector<32x1xi32>
    %c0_i32_80 = arith.constant 0 : i32
    %166 = vector.broadcast %c0_i32_80 : i32 to vector<32x1xi32>
    %167 = arith.cmpi slt, %163, %166 : vector<32x1xi32>
    %c0_i32_81 = arith.constant 0 : i32
    %168 = arith.cmpi slt, %161, %c0_i32_81 : i32
    %169 = vector.broadcast %168 : i1 to vector<32x1xi1>
    %170 = vector.broadcast %169 : vector<32x1xi1> to vector<32x1xi1>
    %171 = arith.xori %167, %170 : vector<32x1xi1>
    %172 = arith.andi %171, %165 : vector<32x1xi1>
    %173 = vector.broadcast %161 : i32 to vector<32x1xi32>
    %174 = arith.addi %163, %173 : vector<32x1xi32>
    %175 = arith.select %172, %174, %163 : vector<32x1xi1>, vector<32x1xi32>
    %c0_i32_82 = arith.constant 0 : i32
    %176 = vector.broadcast %c0_i32_82 : i32 to vector<32x1xi32>
    %177 = arith.cmpi eq, %175, %176 : vector<32x1xi32>
    %178 = vector.shape_cast %177 : vector<32x1xi1> to vector<32x1xi1>
    %179 = vector.broadcast %178 : vector<32x1xi1> to vector<32x64xi1>
    %180 = arith.select %179, %158, %159 : vector<32x64xi1>, vector<32x64xf32>
    %181 = arith.addf %157, %180 : vector<32x64xf32>
    %cst_83 = arith.constant 5.000000e-01 : f32
    %182 = vector.broadcast %cst_83 : f32 to vector<32x64xf32>
    %183 = arith.mulf %182, %181 : vector<32x64xf32>
    %cst_84 = arith.constant dense<0.000000e+00> : vector<32xf32>
    %184 = vector.multi_reduction <add>, %183, %cst_84 [1] : vector<32x64xf32> to vector<32xf32>
    %185 = vector.shape_cast %184 : vector<32xf32> to vector<32x1xf32>
    %cst_85 = arith.constant 6.400000e+01 : f32
    %186 = vector.broadcast %cst_85 : f32 to vector<32x1xf32>
    %187 = arith.divf %185, %186 : vector<32x1xf32>
    %188 = vector.broadcast %187 : vector<32x1xf32> to vector<32x64xf32>
    %189 = arith.subf %183, %188 : vector<32x64xf32>
    %190 = arith.mulf %189, %189 : vector<32x64xf32>
    %cst_86 = arith.constant dense<0.000000e+00> : vector<32xf32>
    %191 = vector.multi_reduction <add>, %190, %cst_86 [1] : vector<32x64xf32> to vector<32xf32>
    %192 = vector.shape_cast %191 : vector<32xf32> to vector<32x1xf32>
    %cst_87 = arith.constant 6.400000e+01 : f32
    %193 = vector.broadcast %cst_87 : f32 to vector<32x1xf32>
    %194 = arith.divf %192, %193 : vector<32x1xf32>
    %195 = vector.broadcast %187 : vector<32x1xf32> to vector<32x64xf32>
    %196 = arith.subf %183, %195 : vector<32x64xf32>
    %cst_88 = arith.constant 9.99999974E-6 : f32
    %197 = vector.broadcast %cst_88 : f32 to vector<32x1xf32>
    %198 = arith.addf %194, %197 : vector<32x1xf32>
    %199 = math.rsqrt %198 : vector<32x1xf32>
    %200 = vector.broadcast %199 : vector<32x1xf32> to vector<32x64xf32>
    %201 = arith.mulf %196, %200 : vector<32x64xf32>
    %202 = vector.broadcast %10 : vector<1x64xf32> to vector<32x64xf32>
    %203 = arith.mulf %201, %202 : vector<32x64xf32>
    %204 = vector.broadcast %11 : vector<1x64xf32> to vector<32x64xf32>
    %205 = arith.addf %203, %204 : vector<32x64xf32>
    %cst_89 = arith.constant 5.000000e-02 : f32
    %206 = vector.broadcast %cst_89 : f32 to vector<32x64xf32>
    %207 = arith.mulf %206, %205 : vector<32x64xf32>
    %208 = arith.maximumf %205, %207 : vector<32x64xf32>
    %209 = arith.truncf %208 : vector<32x64xf32> to vector<32x64xbf16>
    %c0_90 = arith.constant 0 : index
    %c0_91 = arith.constant 0 : index
    %210 = vector.load %arg5[%c0_90, %c0_91] : memref<64x16xbf16, #tpu.memory_space<vmem>>, vector<64x16xbf16>
    %cst_92 = arith.constant dense<0.000000e+00> : vector<32x16xf32>
    %211 = tpu.matmul %209, %210, %cst_92 {dimension_numbers = #tpu.dot_dimension_numbers<[1], [0], [0], [1], [0, 0, 1, 1], [], []>} : vector<32x64xbf16>, vector<64x16xbf16>, vector<32x16xf32> -> vector<32x16xf32>
    %212 = vector.broadcast %12 : vector<1x16xf32> to vector<32x16xf32>
    %213 = arith.addf %211, %212 : vector<32x16xf32>
    %cst_93 = arith.constant dense<0.000000e+00> : vector<32xf32>
    %214 = vector.multi_reduction <add>, %213, %cst_93 [1] : vector<32x16xf32> to vector<32xf32>
    %215 = vector.shape_cast %214 : vector<32xf32> to vector<32x1xf32>
    %cst_94 = arith.constant 1.600000e+01 : f32
    %216 = vector.broadcast %cst_94 : f32 to vector<32x1xf32>
    %217 = arith.divf %215, %216 : vector<32x1xf32>
    %218 = vector.broadcast %217 : vector<32x1xf32> to vector<32x16xf32>
    %219 = arith.subf %213, %218 : vector<32x16xf32>
    %220 = arith.mulf %219, %219 : vector<32x16xf32>
    %cst_95 = arith.constant dense<0.000000e+00> : vector<32xf32>
    %221 = vector.multi_reduction <add>, %220, %cst_95 [1] : vector<32x16xf32> to vector<32xf32>
    %222 = vector.shape_cast %221 : vector<32xf32> to vector<32x1xf32>
    %cst_96 = arith.constant 1.600000e+01 : f32
    %223 = vector.broadcast %cst_96 : f32 to vector<32x1xf32>
    %224 = arith.divf %222, %223 : vector<32x1xf32>
    %225 = vector.broadcast %217 : vector<32x1xf32> to vector<32x16xf32>
    %226 = arith.subf %213, %225 : vector<32x16xf32>
    %cst_97 = arith.constant 9.99999974E-6 : f32
    %227 = vector.broadcast %cst_97 : f32 to vector<32x1xf32>
    %228 = arith.addf %224, %227 : vector<32x1xf32>
    %229 = math.rsqrt %228 : vector<32x1xf32>
    %230 = vector.broadcast %229 : vector<32x1xf32> to vector<32x16xf32>
    %231 = arith.mulf %226, %230 : vector<32x16xf32>
    %232 = vector.broadcast %13 : vector<1x16xf32> to vector<32x16xf32>
    %233 = arith.mulf %231, %232 : vector<32x16xf32>
    %234 = vector.broadcast %14 : vector<1x16xf32> to vector<32x16xf32>
    %235 = arith.addf %233, %234 : vector<32x16xf32>
    %cst_98 = arith.constant 5.000000e-02 : f32
    %236 = vector.broadcast %cst_98 : f32 to vector<32x16xf32>
    %237 = arith.mulf %236, %235 : vector<32x16xf32>
    %238 = arith.maximumf %235, %237 : vector<32x16xf32>
    %239 = arith.truncf %238 : vector<32x16xf32> to vector<32x16xbf16>
    %c0_99 = arith.constant 0 : index
    %c0_100 = arith.constant 0 : index
    %240 = vector.load %arg6[%c0_99, %c0_100] : memref<16x4xbf16, #tpu.memory_space<vmem>>, vector<16x4xbf16>
    %cst_101 = arith.constant dense<0.000000e+00> : vector<32x4xf32>
    %241 = tpu.matmul %239, %240, %cst_101 {dimension_numbers = #tpu.dot_dimension_numbers<[1], [0], [0], [1], [0, 0, 1, 1], [], []>} : vector<32x16xbf16>, vector<16x4xbf16>, vector<32x4xf32> -> vector<32x4xf32>
    %242 = vector.broadcast %15 : vector<1x4xf32> to vector<32x4xf32>
    %243 = arith.addf %241, %242 : vector<32x4xf32>
    %cst_102 = arith.constant dense<0.000000e+00> : vector<32xf32>
    %244 = vector.multi_reduction <add>, %243, %cst_102 [1] : vector<32x4xf32> to vector<32xf32>
    %245 = vector.shape_cast %244 : vector<32xf32> to vector<32x1xf32>
    %cst_103 = arith.constant 4.000000e+00 : f32
    %246 = vector.broadcast %cst_103 : f32 to vector<32x1xf32>
    %247 = arith.divf %245, %246 : vector<32x1xf32>
    %248 = vector.broadcast %247 : vector<32x1xf32> to vector<32x4xf32>
    %249 = arith.subf %243, %248 : vector<32x4xf32>
    %250 = arith.mulf %249, %249 : vector<32x4xf32>
    %cst_104 = arith.constant dense<0.000000e+00> : vector<32xf32>
    %251 = vector.multi_reduction <add>, %250, %cst_104 [1] : vector<32x4xf32> to vector<32xf32>
    %252 = vector.shape_cast %251 : vector<32xf32> to vector<32x1xf32>
    %cst_105 = arith.constant 4.000000e+00 : f32
    %253 = vector.broadcast %cst_105 : f32 to vector<32x1xf32>
    %254 = arith.divf %252, %253 : vector<32x1xf32>
    %255 = vector.broadcast %247 : vector<32x1xf32> to vector<32x4xf32>
    %256 = arith.subf %243, %255 : vector<32x4xf32>
    %cst_106 = arith.constant 9.99999974E-6 : f32
    %257 = vector.broadcast %cst_106 : f32 to vector<32x1xf32>
    %258 = arith.addf %254, %257 : vector<32x1xf32>
    %259 = math.rsqrt %258 : vector<32x1xf32>
    %260 = vector.broadcast %259 : vector<32x1xf32> to vector<32x4xf32>
    %261 = arith.mulf %256, %260 : vector<32x4xf32>
    %262 = vector.broadcast %16 : vector<1x4xf32> to vector<32x4xf32>
    %263 = arith.mulf %261, %262 : vector<32x4xf32>
    %264 = vector.broadcast %17 : vector<1x4xf32> to vector<32x4xf32>
    %265 = arith.addf %263, %264 : vector<32x4xf32>
    %cst_107 = arith.constant 5.000000e-02 : f32
    %266 = vector.broadcast %cst_107 : f32 to vector<32x4xf32>
    %267 = arith.mulf %266, %265 : vector<32x4xf32>
    %268 = arith.maximumf %265, %267 : vector<32x4xf32>
    %269 = vector.broadcast %18 : vector<1x4xf32> to vector<32x4xf32>
    %270 = arith.mulf %268, %269 : vector<32x4xf32>
    %cst_108 = arith.constant dense<0.000000e+00> : vector<32xf32>
    %271 = vector.multi_reduction <add>, %270, %cst_108 [1] : vector<32x4xf32> to vector<32xf32>
    %272 = vector.shape_cast %271 : vector<32xf32> to vector<32x1xf32>
    %273 = vector.extract_strided_slice %272 {offsets = [0, 0], sizes = [16, 1], strides = [1, 1]} : vector<32x1xf32> to vector<16x1xf32>
    %cst_109 = arith.constant dense<0.000000e+00> : vector<1xf32>
    %274 = vector.multi_reduction <add>, %273, %cst_109 [0] : vector<16x1xf32> to vector<1xf32>
    %275 = vector.shape_cast %274 : vector<1xf32> to vector<1x1xf32>
    %276 = vector.extract_strided_slice %272 {offsets = [16, 0], sizes = [16, 1], strides = [1, 1]} : vector<32x1xf32> to vector<16x1xf32>
    %cst_110 = arith.constant dense<0.000000e+00> : vector<1xf32>
    %277 = vector.multi_reduction <add>, %276, %cst_110 [0] : vector<16x1xf32> to vector<1xf32>
    %278 = vector.shape_cast %277 : vector<1xf32> to vector<1x1xf32>
    %279 = tpu.concatenate %275, %278 in 1 : vector<1x1xf32>, vector<1x1xf32> -> vector<1x2xf32>
    %cst_111 = arith.constant 6.250000e-02 : f32
    %280 = vector.broadcast %cst_111 : f32 to vector<1x2xf32>
    %281 = arith.mulf %279, %280 : vector<1x2xf32>
    %282 = vector.broadcast %19 : vector<1x1xf32> to vector<1x2xf32>
    %283 = arith.addf %281, %282 : vector<1x2xf32>
    %cst_112 = arith.constant 0.000000e+00 : f32
    %284 = vector.broadcast %cst_112 : f32 to vector<1x2xf32>
    %285 = arith.subf %284, %283 : vector<1x2xf32>
    %286 = math.exp %285 : vector<1x2xf32>
    %cst_113 = arith.constant 1.000000e+00 : f32
    %287 = vector.broadcast %cst_113 : f32 to vector<1x2xf32>
    %288 = arith.addf %287, %286 : vector<1x2xf32>
    %289 = tpu.reciprocal %288 {approx = true} : vector<1x2xf32> -> vector<1x2xf32>
    %290 = vector.shape_cast %289 : vector<1x2xf32> to vector<1x1x2xf32>
    %c0_114 = arith.constant 0 : index
    %c0_115 = arith.constant 0 : index
    %c0_116 = arith.constant 0 : index
    %291 = vector.load %arg11[%c0_114, %c0_115, %c0_116] : memref<1x1x2xf32, #tpu.memory_space<vmem>>, vector<1x1x2xf32>
    tpu.vector_store %arg11[%c0_114, %c0_115, %c0_116], %290 {strides = array<i32>} : memref<1x1x2xf32, #tpu.memory_space<vmem>>, vector<1x1x2xf32>,
    return
  }
  func.func @transform_0(%arg0: i32) -> (i32, i32) {
    %c0_i32 = arith.constant 0 : i32
    %c0_i32_0 = arith.constant 0 : i32
    return %arg0, %c0_i32 : i32, i32
  }
  func.func @transform_1(%arg0: i32) -> (i32, i32) {
    %c0_i32 = arith.constant 0 : i32
    %c0_i32_0 = arith.constant 0 : i32
    %c0_i32_1 = arith.constant 0 : i32
    return %c0_i32, %c0_i32_0 : i32, i32
  }
  func.func @transform_2(%arg0: i32) -> (i32, i32, i32) {
    %c0_i32 = arith.constant 0 : i32
    %c0_i32_0 = arith.constant 0 : i32
    %c0_i32_1 = arith.constant 0 : i32
    %c0_i32_2 = arith.constant 0 : i32
    return %c0_i32, %c0_i32_0, %c0_i32_1 : i32, i32, i32
  }
  func.func @transform_3(%arg0: i32) -> (i32, i32) {
    %c0_i32 = arith.constant 0 : i32
    %c0_i32_0 = arith.constant 0 : i32
    %c0_i32_1 = arith.constant 0 : i32
    return %c0_i32, %c0_i32_0 : i32, i32
  }
  func.func @transform_4(%arg0: i32) -> (i32, i32) {
    %c0_i32 = arith.constant 0 : i32
    %c0_i32_0 = arith.constant 0 : i32
    %c0_i32_1 = arith.constant 0 : i32
    return %c0_i32, %c0_i32_0 : i32, i32
  }
  func.func @transform_5(%arg0: i32) -> (i32, i32) {
    %c0_i32 = arith.constant 0 : i32
    %c0_i32_0 = arith.constant 0 : i32
    %c0_i32_1 = arith.constant 0 : i32
    return %c0_i32, %c0_i32_0 : i32, i32
  }
  func.func @transform_6(%arg0: i32) -> (i32, i32) {
    %c0_i32 = arith.constant 0 : i32
    %c0_i32_0 = arith.constant 0 : i32
    %c0_i32_1 = arith.constant 0 : i32
    return %c0_i32, %c0_i32_0 : i32, i32
  }
  func.func @transform_7(%arg0: i32) -> (i32, i32) {
    %c0_i32 = arith.constant 0 : i32
    %c0_i32_0 = arith.constant 0 : i32
    %c0_i32_1 = arith.constant 0 : i32
    return %c0_i32, %c0_i32_0 : i32, i32
  }
  func.func @transform_8(%arg0: i32) -> (i32, i32) {
    %c0_i32 = arith.constant 0 : i32
    %c0_i32_0 = arith.constant 0 : i32
    %c0_i32_1 = arith.constant 0 : i32
    return %c0_i32, %c0_i32_0 : i32, i32
  }
  func.func @transform_9(%arg0: i32) -> (i32, i32) {
    %c0_i32 = arith.constant 0 : i32
    %c0_i32_0 = arith.constant 0 : i32
    %c0_i32_1 = arith.constant 0 : i32
    return %c0_i32, %c0_i32_0 : i32, i32
  }
  func.func @transform_10(%arg0: i32) -> (i32, i32, i32) {
    %c0_i32 = arith.constant 0 : i32
    %c0_i32_0 = arith.constant 0 : i32
    %c0_i32_1 = arith.constant 0 : i32
    return %arg0, %c0_i32, %c0_i32_0 : i32, i32, i32
  }
}

</mosaic_0001>

<llo_original>
// kernel: tpu_custom_call.1
$region0: #{tpu_custom_call.1}
  #allocation0 [shape = 'u32[]', space=smem, size = 0x4, offset = 0x4, fixed_abs, tag = 'smem constant byte address 0x4 - core index']
  #allocation1 [shape = 'u32[144,128]{1,0:T(1,128)}', space=vmem, size = 0x12000, scoped, tag = 'internal scratch']
  %s0 = inlined_call_operand.vmem [shape: bf16[64,32], index: 0, kind: input, shape index: {}]
  %s1 = inlined_call_operand.vmem [shape: bf16[32,32], index: 1, kind: input, shape index: {}]
  %s2 = inlined_call_operand.vmem [shape: bf16[3,32,64], index: 2, kind: input, shape index: {}]
  %s3 = inlined_call_operand.vmem [shape: bf16[32,64], index: 3, kind: input, shape index: {}]
  %s4 = inlined_call_operand.vmem [shape: bf16[64,16], index: 4, kind: input, shape index: {}]
  %s5 = inlined_call_operand.vmem [shape: bf16[16,4], index: 5, kind: input, shape index: {}]
  %s6 = inlined_call_operand.vmem [shape: f32[9,32], index: 6, kind: input, shape index: {}]
  %s7 = inlined_call_operand.vmem [shape: f32[3,64], index: 7, kind: input, shape index: {}]
  %s8 = inlined_call_operand.vmem [shape: f32[3,16], index: 8, kind: input, shape index: {}]
  %s9 = inlined_call_operand.vmem [shape: f32[5,4], index: 9, kind: input, shape index: {}]
  %s10 = inlined_call_operand.hbm [shape: f32[2,1,2], index: 10, kind: output, shape index: {}]
  %s11 = sld [smem:[#allocation0]]
  $region73: #{tpu_custom_call.1} parent=0
    _
  %s13 = ssub.s32 1, %s11
  %s14 = scalar_select 0, %s13, %s11
  $region1: #{tpu_custom_call.1} parent=0
    #allocation2 [shape = 'u8[1024]{0}', space=vmem, size = 0x400, scoped, tag = 'output window, operand 0']
    #allocation3 [shape = 's32[2]{0}', space=sflag, size = 0x8, scoped, tag = 'scoped memory for tpu_custom_call.1']
    %15 = vsyncpa [#allocation3], 0
    %s16 = scalar_lea.sflag [#allocation3], 1
    %17 = vsyncpa %s16, 0
    loop: start=0, step=1, limit=4
    $region2: #{tpu_custom_call.1} parent=1 // loop_pre_header
      _
    $region3: #{tpu_custom_call.1} parent=1 // loop_header
      %s19 = sphi 0, %s23
      %p20 = scmp.ge.s32.totalorder %s19, 4
      %s29 = sphi 0, %s31
      %s32 = sphi 0, %s29
      %s33 = sphi 0, %s32
      %s49 = sphi 0, %s33
      %s53 = sphi 0, %s53
      %s55 = sphi 0, %s53
      %s56 = sphi 0, %s55
      %s70 = sphi 0, %s56
      %s74 = sphi 0, %s74
      %s76 = sphi 0, %s74
      %s77 = sphi 0, %s76
      %s91 = sphi 0, %s77
      %s95 = sphi 0, %s95
      %s97 = sphi 0, %s95
      %s98 = sphi 0, %s97
      %s112 = sphi 0, %s98
      %s116 = sphi 0, %s116
      %s118 = sphi 0, %s116
      %s119 = sphi 0, %s118
      %s133 = sphi 0, %s119
      %s137 = sphi 0, %s137
      %s139 = sphi 0, %s137
      %s140 = sphi 0, %s139
      %s154 = sphi 0, %s140
      %s158 = sphi 0, %s158
      %s160 = sphi 0, %s158
      %s161 = sphi 0, %s160
      %s175 = sphi 0, %s161
      %s179 = sphi 0, %s179
      %s181 = sphi 0, %s179
      %s182 = sphi 0, %s181
      %s196 = sphi 0, %s182
      %s200 = sphi 0, %s200
      %s202 = sphi 0, %s200
      %s203 = sphi 0, %s202
      %s217 = sphi 0, %s203
      %s221 = sphi 0, %s221
      %s223 = sphi 0, %s221
      %s224 = sphi 0, %s223
      %s238 = sphi 0, %s224
      %s244 = sphi 0, %s246
      %s247 = sphi 0, %s244
      %s248 = sphi 0, %s247
      %s264 = sphi 0, %s248
    $region4: #{tpu_custom_call.1} parent=1 // loop_header_branch
      %22 = sbr.rel (%p20) target = $region8
    $region5: #{tpu_custom_call.1} parent=1 // loop_body
      %s24 = ssub.s32 %s19, 1
      %s25 = ssub.s32 %s19, 2
      %s26 = sadd.s32 %s19, 1
      %s27 = ssub.s32 %s19, %s26
      %p28 = scmp.eq.s32.totalorder %s27, 0
      %s30 = sadd.s32 %s29, 1
      %s31 = scalar_select %p28, %s29, %s30
      %p34 = pneg %p28
      %p35 = scmp.eq.s32.totalorder %s19, 1
      %p36 = por %p34, %p35
      %p37 = scmp.ne.s32.totalorder %s29, %s32
      %p38 = scmp.eq.s32.totalorder %s19, 0
      %p39 = por %p37, %p38
      %p40 = scmp.ne.s32.totalorder %s29, %s32
      %p41 = scmp.eq.s32.totalorder %s24, 1
      %p42 = por %p40, %p41
      %p43 = scmp.ne.s32.totalorder %s32, %s33
      %p44 = scmp.eq.s32.totalorder %s24, 0
      %p45 = por %p43, %p44
      %p46 = scmp.ne.s32.totalorder %s32, %s33
      %p47 = scmp.eq.s32.totalorder %s25, 1
      %p48 = por %p46, %p47
      %p50 = scmp.ne.s32.totalorder %s33, %s49
      %p51 = scmp.eq.s32.totalorder %s25, 0
      %p52 = por %p50, %p51
      %s54 = sadd.s32 %s53, 1
      %p57 = scmp.eq.s32.totalorder %s19, 1
      %p58 = scmp.ne.s32.totalorder %s53, %s55
      %p59 = scmp.eq.s32.totalorder %s19, 0
      %p60 = por %p58, %p59
      %p61 = scmp.ne.s32.totalorder %s53, %s55
      %p62 = scmp.eq.s32.totalorder %s24, 1
      %p63 = por %p61, %p62
      %p64 = scmp.ne.s32.totalorder %s55, %s56
      %p65 = scmp.eq.s32.totalorder %s24, 0
      %p66 = por %p64, %p65
      %p67 = scmp.ne.s32.totalorder %s55, %s56
      %p68 = scmp.eq.s32.totalorder %s25, 1
      %p69 = por %p67, %p68
      %p71 = scmp.ne.s32.totalorder %s56, %s70
      %p72 = scmp.eq.s32.totalorder %s25, 0
      %p73 = por %p71, %p72
      %s75 = sadd.s32 %s74, 1
      %p78 = scmp.eq.s32.totalorder %s19, 1
      %p79 = scmp.ne.s32.totalorder %s74, %s76
      %p80 = scmp.eq.s32.totalorder %s19, 0
      %p81 = por %p79, %p80
      %p82 = scmp.ne.s32.totalorder %s74, %s76
      %p83 = scmp.eq.s32.totalorder %s24, 1
      %p84 = por %p82, %p83
      %p85 = scmp.ne.s32.totalorder %s76, %s77
      %p86 = scmp.eq.s32.totalorder %s24, 0
      %p87 = por %p85, %p86
      %p88 = scmp.ne.s32.totalorder %s76, %s77
      %p89 = scmp.eq.s32.totalorder %s25, 1
      %p90 = por %p88, %p89
      %p92 = scmp.ne.s32.totalorder %s77, %s91
      %p93 = scmp.eq.s32.totalorder %s25, 0
      %p94 = por %p92, %p93
      %s96 = sadd.s32 %s95, 1
      %p99 = scmp.eq.s32.totalorder %s19, 1
      %p100 = scmp.ne.s32.totalorder %s95, %s97
      %p101 = scmp.eq.s32.totalorder %s19, 0
      %p102 = por %p100, %p101
      %p103 = scmp.ne.s32.totalorder %s95, %s97
      %p104 = scmp.eq.s32.totalorder %s24, 1
      %p105 = por %p103, %p104
      %p106 = scmp.ne.s32.totalorder %s97, %s98
      %p107 = scmp.eq.s32.totalorder %s24, 0
      %p108 = por %p106, %p107
      %p109 = scmp.ne.s32.totalorder %s97, %s98
      %p110 = scmp.eq.s32.totalorder %s25, 1
      %p111 = por %p109, %p110
      %p113 = scmp.ne.s32.totalorder %s98, %s112
      %p114 = scmp.eq.s32.totalorder %s25, 0
      %p115 = por %p113, %p114
      %s117 = sadd.s32 %s116, 1
      %p120 = scmp.eq.s32.totalorder %s19, 1
      %p121 = scmp.ne.s32.totalorder %s116, %s118
      %p122 = scmp.eq.s32.totalorder %s19, 0
      %p123 = por %p121, %p122
      %p124 = scmp.ne.s32.totalorder %s116, %s118
      %p125 = scmp.eq.s32.totalorder %s24, 1
      %p126 = por %p124, %p125
      %p127 = scmp.ne.s32.totalorder %s118, %s119
      %p128 = scmp.eq.s32.totalorder %s24, 0
      %p129 = por %p127, %p128
      %p130 = scmp.ne.s32.totalorder %s118, %s119
      %p131 = scmp.eq.s32.totalorder %s25, 1
      %p132 = por %p130, %p131
      %p134 = scmp.ne.s32.totalorder %s119, %s133
      %p135 = scmp.eq.s32.totalorder %s25, 0
      %p136 = por %p134, %p135
      %s138 = sadd.s32 %s137, 1
      %p141 = scmp.eq.s32.totalorder %s19, 1
      %p142 = scmp.ne.s32.totalorder %s137, %s139
      %p143 = scmp.eq.s32.totalorder %s19, 0
      %p144 = por %p142, %p143
      %p145 = scmp.ne.s32.totalorder %s137, %s139
      %p146 = scmp.eq.s32.totalorder %s24, 1
      %p147 = por %p145, %p146
      %p148 = scmp.ne.s32.totalorder %s139, %s140
      %p149 = scmp.eq.s32.totalorder %s24, 0
      %p150 = por %p148, %p149
      %p151 = scmp.ne.s32.totalorder %s139, %s140
      %p152 = scmp.eq.s32.totalorder %s25, 1
      %p153 = por %p151, %p152
      %p155 = scmp.ne.s32.totalorder %s140, %s154
      %p156 = scmp.eq.s32.totalorder %s25, 0
      %p157 = por %p155, %p156
      %s159 = sadd.s32 %s158, 1
      %p162 = scmp.eq.s32.totalorder %s19, 1
      %p163 = scmp.ne.s32.totalorder %s158, %s160
      %p164 = scmp.eq.s32.totalorder %s19, 0
      %p165 = por %p163, %p164
      %p166 = scmp.ne.s32.totalorder %s158, %s160
      %p167 = scmp.eq.s32.totalorder %s24, 1
      %p168 = por %p166, %p167
      %p169 = scmp.ne.s32.totalorder %s160, %s161
      %p170 = scmp.eq.s32.totalorder %s24, 0
      %p171 = por %p169, %p170
      %p172 = scmp.ne.s32.totalorder %s160, %s161
      %p173 = scmp.eq.s32.totalorder %s25, 1
      %p174 = por %p172, %p173
      %p176 = scmp.ne.s32.totalorder %s161, %s175
      %p177 = scmp.eq.s32.totalorder %s25, 0
      %p178 = por %p176, %p177
      %s180 = sadd.s32 %s179, 1
      %p183 = scmp.eq.s32.totalorder %s19, 1
      %p184 = scmp.ne.s32.totalorder %s179, %s181
      %p185 = scmp.eq.s32.totalorder %s19, 0
      %p186 = por %p184, %p185
      %p187 = scmp.ne.s32.totalorder %s179, %s181
      %p188 = scmp.eq.s32.totalorder %s24, 1
      %p189 = por %p187, %p188
      %p190 = scmp.ne.s32.totalorder %s181, %s182
      %p191 = scmp.eq.s32.totalorder %s24, 0
      %p192 = por %p190, %p191
      %p193 = scmp.ne.s32.totalorder %s181, %s182
      %p194 = scmp.eq.s32.totalorder %s25, 1
      %p195 = por %p193, %p194
      %p197 = scmp.ne.s32.totalorder %s182, %s196
      %p198 = scmp.eq.s32.totalorder %s25, 0
      %p199 = por %p197, %p198
      %s201 = sadd.s32 %s200, 1
      %p204 = scmp.eq.s32.totalorder %s19, 1
      %p205 = scmp.ne.s32.totalorder %s200, %s202
      %p206 = scmp.eq.s32.totalorder %s19, 0
      %p207 = por %p205, %p206
      %p208 = scmp.ne.s32.totalorder %s200, %s202
      %p209 = scmp.eq.s32.totalorder %s24, 1
      %p210 = por %p208, %p209
      %p211 = scmp.ne.s32.totalorder %s202, %s203
      %p212 = scmp.eq.s32.totalorder %s24, 0
      %p213 = por %p211, %p212
      %p214 = scmp.ne.s32.totalorder %s202, %s203
      %p215 = scmp.eq.s32.totalorder %s25, 1
      %p216 = por %p214, %p215
      %p218 = scmp.ne.s32.totalorder %s203, %s217
      %p219 = scmp.eq.s32.totalorder %s25, 0
      %p220 = por %p218, %p219
      %s222 = sadd.s32 %s221, 1
      %p225 = scmp.eq.s32.totalorder %s19, 1
      %p226 = scmp.ne.s32.totalorder %s221, %s223
      %p227 = scmp.eq.s32.totalorder %s19, 0
      %p228 = por %p226, %p227
      %p229 = scmp.ne.s32.totalorder %s221, %s223
      %p230 = scmp.eq.s32.totalorder %s24, 1
      %p231 = por %p229, %p230
      %p232 = scmp.ne.s32.totalorder %s223, %s224
      %p233 = scmp.eq.s32.totalorder %s24, 0
      %p234 = por %p232, %p233
      %p235 = scmp.ne.s32.totalorder %s223, %s224
      %p236 = scmp.eq.s32.totalorder %s25, 1
      %p237 = por %p235, %p236
      %p239 = scmp.ne.s32.totalorder %s224, %s238
      %p240 = scmp.eq.s32.totalorder %s25, 0
      %p241 = por %p239, %p240
      %s242 = ssub.s32 %s19, %s26
      %p243 = scmp.eq.s32.totalorder %s242, 0
      %s245 = sadd.s32 %s244, 1
      %s246 = scalar_select %p243, %s244, %s245
      %p249 = pneg %p243
      %p250 = scmp.eq.s32.totalorder %s19, 1
      %p251 = por %p249, %p250
      %p252 = scmp.ne.s32.totalorder %s244, %s247
      %p253 = scmp.eq.s32.totalorder %s19, 0
      %p254 = por %p252, %p253
      %p255 = scmp.ne.s32.totalorder %s244, %s247
      %p256 = scmp.eq.s32.totalorder %s24, 1
      %p257 = por %p255, %p256
      %p258 = scmp.ne.s32.totalorder %s247, %s248
      %p259 = scmp.eq.s32.totalorder %s24, 0
      %p260 = por %p258, %p259
      %p261 = scmp.ne.s32.totalorder %s247, %s248
      %p262 = scmp.eq.s32.totalorder %s25, 1
      %p263 = por %p261, %p262
      %p265 = scmp.ne.s32.totalorder %s248, %s264
      %p266 = scmp.eq.s32.totalorder %s25, 0
      %p267 = por %p265, %p266
      %p268 = scmp.le.s32.totalorder 1, %s19
      %p269 = scmp.lt.s32.totalorder %s19, 3
      %p270 = pnand %p268, %p269
      %p271 = pneg %p270
      // Predicated region
      $region9: #{tpu_custom_call.1} parent=5 // pred_check
        _
      $region10: #{tpu_custom_call.1} parent=5 // pred_check_branch
        %273 = sbr.rel (%p270) target = $region12
      $region11: #{tpu_custom_call.1} parent=5 // pred_region
        %s274 = ssub.s32 %s19, 1
        // Predicated region
        $region13: #{tpu_custom_call.1} parent=11 // pred_check
          %p275 = pneg %p66
        $region14: #{tpu_custom_call.1} parent=11 // pred_check_branch
          %277 = sbr.rel (%p275) target = $region16
        $region15: #{tpu_custom_call.1} parent=11 // pred_region
          _
        $region16: #{tpu_custom_call.1} parent=11 // pred_fallthru
          _
        // Predicated region
        $region17: #{tpu_custom_call.1} parent=11 // pred_check
          %p278 = pneg %p87
        $region18: #{tpu_custom_call.1} parent=11 // pred_check_branch
          %280 = sbr.rel (%p278) target = $region20
        $region19: #{tpu_custom_call.1} parent=11 // pred_region
          _
        $region20: #{tpu_custom_call.1} parent=11 // pred_fallthru
          _
        // Predicated region
        $region21: #{tpu_custom_call.1} parent=11 // pred_check
          %p281 = pneg %p108
        $region22: #{tpu_custom_call.1} parent=11 // pred_check_branch
          %283 = sbr.rel (%p281) target = $region24
        $region23: #{tpu_custom_call.1} parent=11 // pred_region
          _
        $region24: #{tpu_custom_call.1} parent=11 // pred_fallthru
          _
        // Predicated region
        $region25: #{tpu_custom_call.1} parent=11 // pred_check
          %p284 = pneg %p129
        $region26: #{tpu_custom_call.1} parent=11 // pred_check_branch
          %286 = sbr.rel (%p284) target = $region28
        $region27: #{tpu_custom_call.1} parent=11 // pred_region
          _
        $region28: #{tpu_custom_call.1} parent=11 // pred_fallthru
          _
        // Predicated region
        $region29: #{tpu_custom_call.1} parent=11 // pred_check
          %p287 = pneg %p150
        $region30: #{tpu_custom_call.1} parent=11 // pred_check_branch
          %289 = sbr.rel (%p287) target = $region32
        $region31: #{tpu_custom_call.1} parent=11 // pred_region
          _
        $region32: #{tpu_custom_call.1} parent=11 // pred_fallthru
          _
        // Predicated region
        $region33: #{tpu_custom_call.1} parent=11 // pred_check
          %p290 = pneg %p171
        $region34: #{tpu_custom_call.1} parent=11 // pred_check_branch
          %292 = sbr.rel (%p290) target = $region36
        $region35: #{tpu_custom_call.1} parent=11 // pred_region
          _
        $region36: #{tpu_custom_call.1} parent=11 // pred_fallthru
          _
        // Predicated region
        $region37: #{tpu_custom_call.1} parent=11 // pred_check
          %p293 = pneg %p192
        $region38: #{tpu_custom_call.1} parent=11 // pred_check_branch
          %295 = sbr.rel (%p293) target = $region40
        $region39: #{tpu_custom_call.1} parent=11 // pred_region
          _
        $region40: #{tpu_custom_call.1} parent=11 // pred_fallthru
          _
        // Predicated region
        $region41: #{tpu_custom_call.1} parent=11 // pred_check
          %p296 = pneg %p213
        $region42: #{tpu_custom_call.1} parent=11 // pred_check_branch
          %298 = sbr.rel (%p296) target = $region44
        $region43: #{tpu_custom_call.1} parent=11 // pred_region
          _
        $region44: #{tpu_custom_call.1} parent=11 // pred_fallthru
          _
        // Predicated region
        $region45: #{tpu_custom_call.1} parent=11 // pred_check
          %p299 = pneg %p234
        $region46: #{tpu_custom_call.1} parent=11 // pred_check_branch
          %301 = sbr.rel (%p299) target = $region48
        $region47: #{tpu_custom_call.1} parent=11 // pred_region
          _
        $region48: #{tpu_custom_call.1} parent=11 // pred_fallthru
          _
      $region12: #{tpu_custom_call.1} parent=5 // pred_fallthru
        _
      %p302 = scmp.lt.s32.totalorder %s19, 2
      // Predicated region
      $region49: #{tpu_custom_call.1} parent=5 // pred_check
        %p303 = pneg %p302
      $region50: #{tpu_custom_call.1} parent=5 // pred_check_branch
        %305 = sbr.rel (%p303) target = $region52
      $region51: #{tpu_custom_call.1} parent=5 // pred_region
        // Predicated region
        $region53: #{tpu_custom_call.1} parent=51 // pred_check
          %p306 = pneg %p39
        $region54: #{tpu_custom_call.1} parent=51 // pred_check_branch
          %308 = sbr.rel (%p306) target = $region56
        $region55: #{tpu_custom_call.1} parent=51 // pred_region
          %s309 = smul.u32 4, %s19
          %p310 = scmp.lt.s32.totalorder %s309, 7
          %s311 = scalar_select %p310, %s309, 7
          %s312 = smul.addr %s311, 4
          %s313 = scalar_lea.vmem %s0, %s312
          %s314 = smul.u32 4, %s19
        $region56: #{tpu_custom_call.1} parent=51 // pred_fallthru
          _
      $region52: #{tpu_custom_call.1} parent=5 // pred_fallthru
        _
      %p315 = scmp.le.s32.totalorder 1, %s19
      %p316 = scmp.lt.s32.totalorder %s19, 3
      %p317 = pnand %p315, %p316
      %p318 = pneg %p317
      // Predicated region
      $region57: #{tpu_custom_call.1} parent=5 // pred_check
        _
      $region58: #{tpu_custom_call.1} parent=5 // pred_check_branch
        %320 = sbr.rel (%p317) target = $region60
      $region59: #{tpu_custom_call.1} parent=5 // pred_region
        %s321 = ssub.s32 %s19, 1
        %s322 = smul.u32 4, %s24
        %p323 = scmp.lt.s32.totalorder %s322, 7
        %s324 = scalar_select %p323, %s322, 7
        %s325 = smul.addr %s324, 4
        %s326 = scalar_lea.vmem %s0, %s325
        %p327 = pneg %p45
        %p328 = pneg %p42
        %p329 = pneg %p66
        %p330 = pneg %p63
        %p331 = pneg %p87
        %p332 = pneg %p84
        %p333 = pneg %p108
        %p334 = pneg %p105
        %p335 = pneg %p129
        %p336 = pneg %p126
        %p337 = pneg %p150
        %p338 = pneg %p147
        %p339 = pneg %p171
        %p340 = pneg %p168
        %p341 = pneg %p192
        %p342 = pneg %p189
        %p343 = pneg %p213
        %p344 = pneg %p210
        %p345 = pneg %p234
        %p346 = pneg %p231
        %p347 = pneg %p260
        %p348 = pneg %p257
        %s349 = sand.u32 %s247, 1
        %s350 = scalar_lea.sflag [#allocation3], %s349
        %s351 = sand.u32 %s247, 1
        %s352 = scalar_lea.vmem [#allocation2], %s351
        %s353 = smul.u32 4, %s24
        %p354 = scmp.lt.s32.totalorder %s353, 7
        %s355 = scalar_select %p354, %s353, 7
        %s356 = smul.addr %s355, 4
        %s357 = scalar_lea.vmem %s0, %s356
        %s358 = smul.u32 4, %s24
        %v360 = vld [vmem:[%s6] sm:$0x1]
        %v361 = vld [vmem:[%s6 + $0x1] sm:$0x1]
        %v362 = vld [vmem:[%s6 + $0x2] sm:$0x1]
        %v363 = vld [vmem:[%s6 + $0x3] sm:$0x1]
        %v364 = vld [vmem:[%s6 + $0x4] sm:$0x1]
        %v365 = vld [vmem:[%s6 + $0x5] sm:$0x1]
        %v366 = vld [vmem:[%s6 + $0x6] sm:$0x1]
        %v367 = vld [vmem:[%s6 + $0x7] sm:$0x1]
        %v368 = vld [vmem:[%s6 + $0x8] sm:$0x1]
        %v369 = vld [vmem:[%s7] sm:$0x1]
        %v370 = vld [vmem:[%s7 + $0x1] sm:$0x1]
        %v371 = vld [vmem:[%s7 + $0x2] sm:$0x1]
        %v372 = vld [vmem:[%s8] sm:$0x1]
        %v373 = vld [vmem:[%s8 + $0x1] sm:$0x1]
        %v374 = vld [vmem:[%s8 + $0x2] sm:$0x1]
        %v375 = vld [vmem:[%s9] sm:$0x1]
        %v376 = vld [vmem:[%s9 + $0x1] sm:$0x1]
        %v377 = vld [vmem:[%s9 + $0x2] sm:$0x1]
        %v378 = vld [vmem:[%s9 + $0x3] sm:$0x1]
        %v379 = vld [vmem:[%s9 + $0x4] sm:$0x1]
        %v380 = vld [vmem:[%s357] sm:$0xf]
        %v381 = vld [vmem:[%s357 + $0x4] sm:$0xf]
        %v382 = vld [vmem:[%s357 + $0x8] sm:$0xf]
        %v383 = vld [vmem:[%s357 + $0xc] sm:$0xf]
        %v384 = vlaneseq
        %v385 = vshrl.u32 %v384, 7
        %v386 = vadd.s32 %v385, 8
        %v387 = vadd.s32 %v385, 16
        %v388 = vadd.s32 %v385, 24
        %vm389 = vcmp.lt.s32.totalorder %v385, 0
        %v390 = vsub.s32 0, %v385
        %v391 = vsel %vm389, %v390, %v385
        %v392 = vshrl.u32 %v391, 4
        %v393 = vand.u32 %v391, 15
        %v394 = vsub.s32 0, %v393
        %v395 = vsel %vm389, %v394, %v393
        %vm396 = vcmp.lt.s32.totalorder %v386, 0
        %v397 = vsub.s32 0, %v386
        %v398 = vsel %vm396, %v397, %v386
        %v399 = vshrl.u32 %v398, 4
        %v400 = vand.u32 %v398, 15
        %v401 = vsub.s32 0, %v400
        %v402 = vsel %vm396, %v401, %v400
        %vm403 = vcmp.lt.s32.totalorder %v387, 0
        %v404 = vsub.s32 0, %v387
        %v405 = vsel %vm403, %v404, %v387
        %v406 = vshrl.u32 %v405, 4
        %v407 = vand.u32 %v405, 15
        %v408 = vsub.s32 0, %v407
        %v409 = vsel %vm403, %v408, %v407
        %vm410 = vcmp.lt.s32.totalorder %v388, 0
        %v411 = vsub.s32 0, %v388
        %v412 = vsel %vm410, %v411, %v388
        %v413 = vshrl.u32 %v412, 4
        %v414 = vand.u32 %v412, 15
        %v415 = vsub.s32 0, %v414
        %v416 = vsel %vm410, %v415, %v414
        %vm417 = vcmp.ne.s32.totalorder %v395, 0
        %vm418 = vcmp.ne.s32.totalorder %v402, 0
        %vm419 = vcmp.ne.s32.totalorder %v409, 0
        %vm420 = vcmp.ne.s32.totalorder %v416, 0
        %vm421 = vcmp.lt.s32.totalorder %v395, 0
        %vm422 = vcmp.lt.s32.totalorder %v402, 0
        %vm423 = vcmp.lt.s32.totalorder %v409, 0
        %vm424 = vcmp.lt.s32.totalorder %v416, 0
        %vm425 = vmand %vm421, %vm417
        %vm426 = vmand %vm422, %vm418
        %vm427 = vmand %vm423, %vm419
        %vm428 = vmand %vm424, %vm420
        %v429 = vadd.s32 %v395, 16
        %v430 = vadd.s32 %v402, 16
        %v431 = vadd.s32 %v409, 16
        %v432 = vadd.s32 %v416, 16
        %v433 = vsel %vm425, %v429, %v395
        %v434 = vsel %vm426, %v430, %v402
        %v435 = vsel %vm427, %v431, %v409
        %v436 = vsel %vm428, %v432, %v416
        %v437 = vld [vmem:[%s1] sm:$0xf]
        %v438 = vld [vmem:[%s1 + $0x4] sm:$0xf]
        %v439 = vld [vmem:[%s1 + $0x8] sm:$0xf]
        %v440 = vld [vmem:[%s1 + $0xc] sm:$0xf]
        %v441 = vlaneseq
        %v442 = vshrl.u32 %v441, 7
        %v443 = vsub.s32 0, %v442
        %v444 = vrot.slane %v360, %v443
        %v449 = vunpack.c.l.b16 %v380
        %v450 = vunpack.c.l.b16 %v381
        %v451 = vunpack.c.l.b16 %v382
        %v452 = vunpack.c.l.b16 %v383
        %v453 = vpack.c.b16 %v450, %v449
        %v454 = vpack.c.b16 %v452, %v451
        %v459 = vunpack.c.l.b16 %v437
        %v460 = vunpack.c.l.b16 %v438
        %v461 = vunpack.c.l.b16 %v439
        %v462 = vunpack.c.l.b16 %v440
        %v463 = vpack.c.b16 %v460, %v459
        %v464 = vpack.c.b16 %v462, %v461
        %vm467 = vcmask 261120
        %v469 = vsel %vm467, %v453, 0
        %v472 = vsel %vm467, %v454, 0
        %474 = vmatprep.subr.bf16.mxu0 0
        %475 = vmatpush1.bf16.msra.mxu0 %v463
        %476 = vmatprep.subr.bf16.mxu0 0
        %477 = vmatpush1.bf16.msra.mxu0 %v464
        %478 = vmatprep.subr.bf16.mxu0 0
        %479 = vmatpush1.bf16.msra.mxu0 0
        %480 = vmatprep.subr.bf16.mxu0 0
        %481 = vmatpush1.bf16.msra.mxu0 0
        %482 = vmatprep.subr.bf16.mxu0 0
        %483 = vmatpush1.bf16.msra.mxu0 0
        %484 = vmatprep.subr.bf16.mxu0 0
        %485 = vmatpush1.bf16.msra.mxu0 0
        %486 = vmatprep.subr.bf16.mxu0 0
        %487 = vmatpush1.bf16.msra.mxu0 0
        %488 = vmatprep.subr.bf16.mxu0 0
        %489 = vmatpush1.bf16.msra.mxu0 0
        %490 = vmatprep.subr.bf16.mxu0 0
        %491 = vmatpush1.bf16.msra.mxu0 0
        %492 = vmatprep.subr.bf16.mxu0 0
        %493 = vmatpush1.bf16.msra.mxu0 0
        %494 = vmatprep.subr.bf16.mxu0 0
        %495 = vmatpush1.bf16.msra.mxu0 0
        %496 = vmatprep.subr.bf16.mxu0 0
        %497 = vmatpush1.bf16.msra.mxu0 0
        %498 = vmatprep.subr.bf16.mxu0 0
        %499 = vmatpush1.bf16.msra.mxu0 0
        %500 = vmatprep.subr.bf16.mxu0 0
        %501 = vmatpush1.bf16.msra.mxu0 0
        %502 = vmatprep.subr.bf16.mxu0 0
        %503 = vmatpush1.bf16.msra.mxu0 0
        %504 = vmatprep.subr.bf16.mxu0 0
        %505 = vmatpush1.bf16.msra.mxu0 0
        %506 = vmatprep.mubr.bf16.mxu0 0
        %507 = vmatmul.mubr.bf16.gmra.mrb[0].mxu0 %v469
        %v508 = vpop.f32.mrb[0].mxu0
        %v509 = vadd.f32 %v444, %v508
        %v510 = vpop.f32.mrb[0].mxu0
        %v511 = vpop.f32.mrb[0].mxu0
        %v512 = vadd.f32 %v444, %v511
        %v513 = vpop.f32.mrb[0].mxu0
        %514 = vmatprep.mubr.bf16.mxu0 0
        %515 = vmatmul.mubr.bf16.gmra.mrb[0].mxu0 %v472
        %v516 = vpop.f32.mrb[0].mxu0
        %v517 = vadd.f32 %v444, %v516
        %v518 = vpop.f32.mrb[0].mxu0
        %v519 = vpop.f32.mrb[0].mxu0
        %v520 = vadd.f32 %v444, %v519
        %v521 = vpop.f32.mrb[0].mxu0
        %522 = vdwg.mxu0
        %v523 = vsel %vm467, %v509, 0.0
        %524 = vadd.xlane.f32.xlu0 %v523
        %v525 = vpop.xlane.xlu0 %524
        %v526 = vsel %vm467, %v512, 0.0
        %527 = vadd.xlane.f32.xlu0 %v526
        %v528 = vpop.xlane.xlu0 %527
        %v529 = vsel %vm467, %v517, 0.0
        %530 = vadd.xlane.f32.xlu0 %v529
        %v531 = vpop.xlane.xlu0 %530
        %v532 = vsel %vm467, %v520, 0.0
        %533 = vadd.xlane.f32.xlu0 %v532
        %v534 = vpop.xlane.xlu0 %533
        %v535 = vrcp.pop 32.0
        %v536 = vmul.f32 %v525, %v535
        %v537 = vmul.f32 %v528, %v535
        %v538 = vmul.f32 %v531, %v535
        %v539 = vmul.f32 %v534, %v535
        %v540 = vsub.f32 %v509, %v536
        %v541 = vsub.f32 %v512, %v537
        %v542 = vsub.f32 %v517, %v538
        %v543 = vsub.f32 %v520, %v539
        %v544 = vmul.f32 %v540, %v540
        %v545 = vmul.f32 %v541, %v541
        %v546 = vmul.f32 %v542, %v542
        %v547 = vmul.f32 %v543, %v543
        %v548 = vsel %vm467, %v544, 0.0
        %549 = vadd.xlane.f32.xlu0 %v548
        %v550 = vpop.xlane.xlu0 %549
        %v551 = vsel %vm467, %v545, 0.0
        %552 = vadd.xlane.f32.xlu0 %v551
        %v553 = vpop.xlane.xlu0 %552
        %v554 = vsel %vm467, %v546, 0.0
        %555 = vadd.xlane.f32.xlu0 %v554
        %v556 = vpop.xlane.xlu0 %555
        %v557 = vsel %vm467, %v547, 0.0
        %558 = vadd.xlane.f32.xlu0 %v557
        %v559 = vpop.xlane.xlu0 %558
        %v560 = vmul.f32 %v550, %v535
        %v561 = vmul.f32 %v553, %v535
        %v562 = vmul.f32 %v556, %v535
        %v563 = vmul.f32 %v559, %v535
        %v564 = vadd.f32 %v560, 1e-05
        %v565 = vadd.f32 %v561, 1e-05
        %v566 = vadd.f32 %v562, 1e-05
        %v567 = vadd.f32 %v563, 1e-05
        %v568 = vrsqrt.pop %v564
        %v569 = vrsqrt.pop %v565
        %v570 = vrsqrt.pop %v566
        %v571 = vrsqrt.pop %v567
        %v572 = vmul.f32 %v540, %v568
        %v573 = vmul.f32 %v541, %v569
        %v574 = vmul.f32 %v542, %v570
        %v575 = vmul.f32 %v543, %v571
        %v576 = vlaneseq
        %v577 = vshrl.u32 %v576, 7
        %v578 = vsub.s32 0, %v577
        %v579 = vrot.slane %v361, %v578
        %v580 = vmul.f32 %v572, %v579
        %v581 = vmul.f32 %v573, %v579
        %v582 = vmul.f32 %v574, %v579
        %v583 = vmul.f32 %v575, %v579
        %v584 = vlaneseq
        %v585 = vshrl.u32 %v584, 7
        %v586 = vsub.s32 0, %v585
        %v587 = vrot.slane %v362, %v586
        %v588 = vadd.f32 %v580, %v587
        %v589 = vadd.f32 %v581, %v587
        %v590 = vadd.f32 %v582, %v587
        %v591 = vadd.f32 %v583, %v587
        %vm592 = vcmp.eq.s32.totalorder %v433, 0
        %vm593 = vcmp.eq.s32.totalorder %v434, 0
        %vm594 = vcmp.eq.s32.totalorder %v435, 0
        %vm595 = vcmp.eq.s32.totalorder %v436, 0
        %v596 = vrot.slane %v588, 7
        %v597 = vrot.slane %v589, 7
        %v598 = vrot.slane %v590, 7
        %v599 = vrot.slane %v591, 7
        %vm600 = vcmp.lt.s32.totalorder %v385, 1
        %v601 = vsel %vm600, %v598, %v599
        %v602 = vsel %vm600, %v597, %v598
        %v603 = vsel %vm600, %v596, %v597
        %v604 = vsel %vm600, %v599, %v596
        %v605 = vsel %vm592, 1, 0
        %v606 = vsel %vm593, 1, 0
        %v607 = vsel %vm594, 1, 0
        %v608 = vsel %vm595, 1, 0
        %vm609 = vcmp.eq.s32.totalorder %v605, 1
        %vm610 = vcmp.eq.s32.totalorder %v606, 1
        %vm611 = vcmp.eq.s32.totalorder %v607, 1
        %vm612 = vcmp.eq.s32.totalorder %v608, 1
        %v613 = vsel %vm609, 0.0, %v604
        %v614 = vsel %vm610, 0.0, %v603
        %v615 = vsel %vm611, 0.0, %v602
        %v616 = vsel %vm612, 0.0, %v601
        %v617 = vpack.c.bf16 %v614, %v613
        %v618 = vpack.c.bf16 %v616, %v615
        %v619 = vpack.c.bf16 %v589, %v588
        %v620 = vpack.c.bf16 %v591, %v590
        %vm621 = vcmp.eq.s32.totalorder %v433, 15
        %vm622 = vcmp.eq.s32.totalorder %v434, 15
        %vm623 = vcmp.eq.s32.totalorder %v435, 15
        %vm624 = vcmp.eq.s32.totalorder %v436, 15
        %v625 = vrot.slane %v588, 1
        %v626 = vrot.slane %v589, 1
        %v627 = vrot.slane %v590, 1
        %v628 = vrot.slane %v591, 1
        %vm629 = vcmp.lt.s32.totalorder %v385, 7
        %v630 = vsel %vm629, %v627, %v628
        %v631 = vsel %vm629, %v626, %v627
        %v632 = vsel %vm629, %v625, %v626
        %v633 = vsel %vm629, %v628, %v625
        %v634 = vsel %vm621, 1, 0
        %v635 = vsel %vm622, 1, 0
        %v636 = vsel %vm623, 1, 0
        %v637 = vsel %vm624, 1, 0
        %vm638 = vcmp.eq.s32.totalorder %v634, 1
        %vm639 = vcmp.eq.s32.totalorder %v635, 1
        %vm640 = vcmp.eq.s32.totalorder %v636, 1
        %vm641 = vcmp.eq.s32.totalorder %v637, 1
        %v642 = vsel %vm638, 0.0, %v632
        %v643 = vsel %vm639, 0.0, %v631
        %v644 = vsel %vm640, 0.0, %v630
        %v645 = vsel %vm641, 0.0, %v633
        %v646 = vpack.c.bf16 %v643, %v642
        %v647 = vpack.c.bf16 %v645, %v644
        %v648 = vld [vmem:[%s2] sm:$0xf]
        %v649 = vld [vmem:[%s2 + $0x4] sm:$0xf]
        %v650 = vld [vmem:[%s2 + $0x8] sm:$0xf]
        %v651 = vld [vmem:[%s2 + $0xc] sm:$0xf]
        %s652 = scalar_lea.vmem %s2, 16
        %v653 = vld [vmem:[%s652] sm:$0xf]
        %v654 = vld [vmem:[%s652 + $0x4] sm:$0xf]
        %v655 = vld [vmem:[%s652 + $0x8] sm:$0xf]
        %v656 = vld [vmem:[%s652 + $0xc] sm:$0xf]
        %v661 = vunpack.c.l.b16 %v653
        %v662 = vunpack.c.l.b16 %v654
        %v663 = vunpack.c.l.b16 %v655
        %v664 = vunpack.c.l.b16 %v656
        %v665 = vpack.c.b16 %v662, %v661
        %v666 = vpack.c.b16 %v664, %v663
        %v670 = vsel %vm467, %v619, 0
        %v673 = vsel %vm467, %v620, 0
        %675 = vmatprep.subr.bf16.mxu0 0
        %676 = vmatpush1.bf16.msra.mxu0 %v665
        %677 = vmatprep.subr.bf16.mxu0 0
        %678 = vmatpush1.bf16.msra.mxu0 %v666
        %679 = vmatprep.subr.bf16.mxu0 0
        %680 = vmatpush1.bf16.msra.mxu0 0
        %681 = vmatprep.subr.bf16.mxu0 0
        %682 = vmatpush1.bf16.msra.mxu0 0
        %683 = vmatprep.subr.bf16.mxu0 0
        %684 = vmatpush1.bf16.msra.mxu0 0
        %685 = vmatprep.subr.bf16.mxu0 0
        %686 = vmatpush1.bf16.msra.mxu0 0
        %687 = vmatprep.subr.bf16.mxu0 0
        %688 = vmatpush1.bf16.msra.mxu0 0
        %689 = vmatprep.subr.bf16.mxu0 0
        %690 = vmatpush1.bf16.msra.mxu0 0
        %691 = vmatprep.subr.bf16.mxu0 0
        %692 = vmatpush1.bf16.msra.mxu0 0
        %693 = vmatprep.subr.bf16.mxu0 0
        %694 = vmatpush1.bf16.msra.mxu0 0
        %695 = vmatprep.subr.bf16.mxu0 0
        %696 = vmatpush1.bf16.msra.mxu0 0
        %697 = vmatprep.subr.bf16.mxu0 0
        %698 = vmatpush1.bf16.msra.mxu0 0
        %699 = vmatprep.subr.bf16.mxu0 0
        %700 = vmatpush1.bf16.msra.mxu0 0
        %701 = vmatprep.subr.bf16.mxu0 0
        %702 = vmatpush1.bf16.msra.mxu0 0
        %703 = vmatprep.subr.bf16.mxu0 0
        %704 = vmatpush1.bf16.msra.mxu0 0
        %705 = vmatprep.subr.bf16.mxu0 0
        %706 = vmatpush1.bf16.msra.mxu0 0
        %707 = vmatprep.mubr.bf16.mxu0 0
        %708 = vmatmul.mubr.bf16.gmra.mrb[0].mxu0 %v670
        %v709 = vpop.f32.mrb[0].mxu0
        %v710 = vadd.f32 0.0, %v709
        %v711 = vpop.f32.mrb[0].mxu0
        %v712 = vpop.f32.mrb[0].mxu0
        %v713 = vadd.f32 0.0, %v712
        %v714 = vpop.f32.mrb[0].mxu0
        %715 = vmatprep.mubr.bf16.mxu0 0
        %716 = vmatmul.mubr.bf16.gmra.mrb[0].mxu0 %v673
        %v717 = vpop.f32.mrb[0].mxu0
        %v718 = vadd.f32 0.0, %v717
        %v719 = vpop.f32.mrb[0].mxu0
        %v720 = vpop.f32.mrb[0].mxu0
        %v721 = vadd.f32 0.0, %v720
        %v722 = vpop.f32.mrb[0].mxu0
        %723 = vdwg.mxu0
        %v728 = vunpack.c.l.b16 %v648
        %v729 = vunpack.c.l.b16 %v649
        %v730 = vunpack.c.l.b16 %v650
        %v731 = vunpack.c.l.b16 %v651
        %v732 = vpack.c.b16 %v729, %v728
        %v733 = vpack.c.b16 %v731, %v730
        %v737 = vsel %vm467, %v617, 0
        %v740 = vsel %vm467, %v618, 0
        %742 = vmatprep.subr.bf16.mxu0 0
        %743 = vmatpush1.bf16.msra.mxu0 %v732
        %744 = vmatprep.subr.bf16.mxu0 0
        %745 = vmatpush1.bf16.msra.mxu0 %v733
        %746 = vmatprep.subr.bf16.mxu0 0
        %747 = vmatpush1.bf16.msra.mxu0 0
        %748 = vmatprep.subr.bf16.mxu0 0
        %749 = vmatpush1.bf16.msra.mxu0 0
        %750 = vmatprep.subr.bf16.mxu0 0
        %751 = vmatpush1.bf16.msra.mxu0 0
        %752 = vmatprep.subr.bf16.mxu0 0
        %753 = vmatpush1.bf16.msra.mxu0 0
        %754 = vmatprep.subr.bf16.mxu0 0
        %755 = vmatpush1.bf16.msra.mxu0 0
        %756 = vmatprep.subr.bf16.mxu0 0
        %757 = vmatpush1.bf16.msra.mxu0 0
        %758 = vmatprep.subr.bf16.mxu0 0
        %759 = vmatpush1.bf16.msra.mxu0 0
        %760 = vmatprep.subr.bf16.mxu0 0
        %761 = vmatpush1.bf16.msra.mxu0 0
        %762 = vmatprep.subr.bf16.mxu0 0
        %763 = vmatpush1.bf16.msra.mxu0 0
        %764 = vmatprep.subr.bf16.mxu0 0
        %765 = vmatpush1.bf16.msra.mxu0 0
        %766 = vmatprep.subr.bf16.mxu0 0
        %767 = vmatpush1.bf16.msra.mxu0 0
        %768 = vmatprep.subr.bf16.mxu0 0
        %769 = vmatpush1.bf16.msra.mxu0 0
        %770 = vmatprep.subr.bf16.mxu0 0
        %771 = vmatpush1.bf16.msra.mxu0 0
        %772 = vmatprep.subr.bf16.mxu0 0
        %773 = vmatpush1.bf16.msra.mxu0 0
        %774 = vmatprep.mubr.bf16.mxu0 0
        %775 = vmatmul.mubr.bf16.gmra.mrb[0].mxu0 %v737
        %v776 = vpop.f32.mrb[0].mxu0
        %v777 = vadd.f32 %v710, %v776
        %v778 = vpop.f32.mrb[0].mxu0
        %v779 = vpop.f32.mrb[0].mxu0
        %v780 = vadd.f32 %v713, %v779
        %v781 = vpop.f32.mrb[0].mxu0
        %782 = vmatprep.mubr.bf16.mxu0 0
        %783 = vmatmul.mubr.bf16.gmra.mrb[0].mxu0 %v740
        %v784 = vpop.f32.mrb[0].mxu0
        %v785 = vadd.f32 %v718, %v784
        %v786 = vpop.f32.mrb[0].mxu0
        %v787 = vpop.f32.mrb[0].mxu0
        %v788 = vadd.f32 %v721, %v787
        %v789 = vpop.f32.mrb[0].mxu0
        %790 = vdwg.mxu0
        %s791 = scalar_lea.vmem %s2, 32
        %v792 = vld [vmem:[%s791] sm:$0xf]
        %v793 = vld [vmem:[%s791 + $0x4] sm:$0xf]
        %v794 = vld [vmem:[%s791 + $0x8] sm:$0xf]
        %v795 = vld [vmem:[%s791 + $0xc] sm:$0xf]
        %v800 = vunpack.c.l.b16 %v792
        %v801 = vunpack.c.l.b16 %v793
        %v802 = vunpack.c.l.b16 %v794
        %v803 = vunpack.c.l.b16 %v795
        %v804 = vpack.c.b16 %v801, %v800
        %v805 = vpack.c.b16 %v803, %v802
        %v809 = vsel %vm467, %v646, 0
        %v812 = vsel %vm467, %v647, 0
        %814 = vmatprep.subr.bf16.mxu0 0
        %815 = vmatpush1.bf16.msra.mxu0 %v804
        %816 = vmatprep.subr.bf16.mxu0 0
        %817 = vmatpush1.bf16.msra.mxu0 %v805
        %818 = vmatprep.subr.bf16.mxu0 0
        %819 = vmatpush1.bf16.msra.mxu0 0
        %820 = vmatprep.subr.bf16.mxu0 0
        %821 = vmatpush1.bf16.msra.mxu0 0
        %822 = vmatprep.subr.bf16.mxu0 0
        %823 = vmatpush1.bf16.msra.mxu0 0
        %824 = vmatprep.subr.bf16.mxu0 0
        %825 = vmatpush1.bf16.msra.mxu0 0
        %826 = vmatprep.subr.bf16.mxu0 0
        %827 = vmatpush1.bf16.msra.mxu0 0
        %828 = vmatprep.subr.bf16.mxu0 0
        %829 = vmatpush1.bf16.msra.mxu0 0
        %830 = vmatprep.subr.bf16.mxu0 0
        %831 = vmatpush1.bf16.msra.mxu0 0
        %832 = vmatprep.subr.bf16.mxu0 0
        %833 = vmatpush1.bf16.msra.mxu0 0
        %834 = vmatprep.subr.bf16.mxu0 0
        %835 = vmatpush1.bf16.msra.mxu0 0
        %836 = vmatprep.subr.bf16.mxu0 0
        %837 = vmatpush1.bf16.msra.mxu0 0
        %838 = vmatprep.subr.bf16.mxu0 0
        %839 = vmatpush1.bf16.msra.mxu0 0
        %840 = vmatprep.subr.bf16.mxu0 0
        %841 = vmatpush1.bf16.msra.mxu0 0
        %842 = vmatprep.subr.bf16.mxu0 0
        %843 = vmatpush1.bf16.msra.mxu0 0
        %844 = vmatprep.subr.bf16.mxu0 0
        %845 = vmatpush1.bf16.msra.mxu0 0
        %846 = vmatprep.mubr.bf16.mxu0 0
        %847 = vmatmul.mubr.bf16.gmra.mrb[0].mxu0 %v809
        %v848 = vpop.f32.mrb[0].mxu0
        %v849 = vadd.f32 0.0, %v848
        %v850 = vpop.f32.mrb[0].mxu0
        %v851 = vpop.f32.mrb[0].mxu0
        %v852 = vadd.f32 0.0, %v851
        %v853 = vpop.f32.mrb[0].mxu0
        %854 = vmatprep.mubr.bf16.mxu0 0
        %855 = vmatmul.mubr.bf16.gmra.mrb[0].mxu0 %v812
        %v856 = vpop.f32.mrb[0].mxu0
        %v857 = vadd.f32 0.0, %v856
        %v858 = vpop.f32.mrb[0].mxu0
        %v859 = vpop.f32.mrb[0].mxu0
        %v860 = vadd.f32 0.0, %v859
        %v861 = vpop.f32.mrb[0].mxu0
        %862 = vdwg.mxu0
        %v863 = vadd.f32 %v777, %v849
        %v864 = vadd.f32 %v780, %v852
        %v865 = vadd.f32 %v785, %v857
        %v866 = vadd.f32 %v788, %v860
        %v867 = vlaneseq
        %v868 = vshrl.u32 %v867, 7
        %v869 = vsub.s32 0, %v868
        %v870 = vrot.slane %v363, %v869
        %v871 = vadd.f32 %v863, %v870
        %v872 = vadd.f32 %v864, %v870
        %v873 = vadd.f32 %v865, %v870
        %v874 = vadd.f32 %v866, %v870
        %v875 = vsel %vm467, %v871, 0.0
        %876 = vadd.xlane.f32.xlu0 %v875
        %v877 = vpop.xlane.xlu0 %876
        %v878 = vsel %vm467, %v872, 0.0
        %879 = vadd.xlane.f32.xlu0 %v878
        %v880 = vpop.xlane.xlu0 %879
        %v881 = vsel %vm467, %v873, 0.0
        %882 = vadd.xlane.f32.xlu0 %v881
        %v883 = vpop.xlane.xlu0 %882
        %v884 = vsel %vm467, %v874, 0.0
        %885 = vadd.xlane.f32.xlu0 %v884
        %v886 = vpop.xlane.xlu0 %885
        %v887 = vmul.f32 %v877, %v535
        %v888 = vmul.f32 %v880, %v535
        %v889 = vmul.f32 %v883, %v535
        %v890 = vmul.f32 %v886, %v535
        %v891 = vsub.f32 %v871, %v887
        %v892 = vsub.f32 %v872, %v888
        %v893 = vsub.f32 %v873, %v889
        %v894 = vsub.f32 %v874, %v890
        %v895 = vmul.f32 %v891, %v891
        %v896 = vmul.f32 %v892, %v892
        %v897 = vmul.f32 %v893, %v893
        %v898 = vmul.f32 %v894, %v894
        %v899 = vsel %vm467, %v895, 0.0
        %900 = vadd.xlane.f32.xlu0 %v899
        %v901 = vpop.xlane.xlu0 %900
        %v902 = vsel %vm467, %v896, 0.0
        %903 = vadd.xlane.f32.xlu0 %v902
        %v904 = vpop.xlane.xlu0 %903
        %v905 = vsel %vm467, %v897, 0.0
        %906 = vadd.xlane.f32.xlu0 %v905
        %v907 = vpop.xlane.xlu0 %906
        %v908 = vsel %vm467, %v898, 0.0
        %909 = vadd.xlane.f32.xlu0 %v908
        %v910 = vpop.xlane.xlu0 %909
        %v911 = vmul.f32 %v901, %v535
        %v912 = vmul.f32 %v904, %v535
        %v913 = vmul.f32 %v907, %v535
        %v914 = vmul.f32 %v910, %v535
        %v915 = vadd.f32 %v911, 1e-05
        %v916 = vadd.f32 %v912, 1e-05
        %v917 = vadd.f32 %v913, 1e-05
        %v918 = vadd.f32 %v914, 1e-05
        %v919 = vrsqrt.pop %v915
        %v920 = vrsqrt.pop %v916
        %v921 = vrsqrt.pop %v917
        %v922 = vrsqrt.pop %v918
        %v923 = vmul.f32 %v891, %v919
        %v924 = vmul.f32 %v892, %v920
        %v925 = vmul.f32 %v893, %v921
        %v926 = vmul.f32 %v894, %v922
        %v927 = vlaneseq
        %v928 = vshrl.u32 %v927, 7
        %v929 = vsub.s32 0, %v928
        %v930 = vrot.slane %v365, %v929
        %v931 = vmul.f32 %v923, %v930
        %v932 = vmul.f32 %v924, %v930
        %v933 = vmul.f32 %v925, %v930
        %v934 = vmul.f32 %v926, %v930
        %v935 = vlaneseq
        %v936 = vshrl.u32 %v935, 7
        %v937 = vsub.s32 0, %v936
        %v938 = vrot.slane %v366, %v937
        %v939 = vadd.f32 %v931, %v938
        %v940 = vadd.f32 %v932, %v938
        %v941 = vadd.f32 %v933, %v938
        %v942 = vadd.f32 %v934, %v938
        %v943 = vlaneseq
        %v944 = vshrl.u32 %v943, 7
        %v945 = vsub.s32 0, %v944
        %v946 = vrot.slane %v364, %v945
        %948 = vrot.lane.b32.xlu0 %v946, 32
        %v949 = vpop.permute.xlu0 %948
        %v951 = vadd.f32 %v863, %v949
        %v952 = vadd.f32 %v864, %v949
        %v953 = vadd.f32 %v865, %v949
        %v954 = vadd.f32 %v866, %v949
        %959 = vrot.lane.b32.xlu0 %v951, 96
        %v960 = vpop.permute.xlu0 %959
        %961 = vrot.lane.b32.xlu0 %v952, 96
        %v962 = vpop.permute.xlu0 %961
        %963 = vrot.lane.b32.xlu0 %v953, 96
        %v964 = vpop.permute.xlu0 %963
        %965 = vrot.lane.b32.xlu0 %v954, 96
        %v966 = vpop.permute.xlu0 %965
        %v971 = vsel %vm467, %v960, 0.0
        %972 = vadd.xlane.f32.xlu0 %v971
        %v973 = vpop.xlane.xlu0 %972
        %v974 = vsel %vm467, %v962, 0.0
        %975 = vadd.xlane.f32.xlu0 %v974
        %v976 = vpop.xlane.xlu0 %975
        %v977 = vsel %vm467, %v964, 0.0
        %978 = vadd.xlane.f32.xlu0 %v977
        %v979 = vpop.xlane.xlu0 %978
        %v980 = vsel %vm467, %v966, 0.0
        %981 = vadd.xlane.f32.xlu0 %v980
        %v982 = vpop.xlane.xlu0 %981
        %v983 = vmul.f32 %v973, %v535
        %v984 = vmul.f32 %v976, %v535
        %v985 = vmul.f32 %v979, %v535
        %v986 = vmul.f32 %v982, %v535
        %v987 = vsub.f32 %v951, %v983
        %v988 = vsub.f32 %v952, %v984
        %v989 = vsub.f32 %v953, %v985
        %v990 = vsub.f32 %v954, %v986
        %v991 = vmul.f32 %v987, %v987
        %v992 = vmul.f32 %v988, %v988
        %v993 = vmul.f32 %v989, %v989
        %v994 = vmul.f32 %v990, %v990
        %999 = vrot.lane.b32.xlu0 %v991, 96
        %v1000 = vpop.permute.xlu0 %999
        %1001 = vrot.lane.b32.xlu0 %v992, 96
        %v1002 = vpop.permute.xlu0 %1001
        %1003 = vrot.lane.b32.xlu0 %v993, 96
        %v1004 = vpop.permute.xlu0 %1003
        %1005 = vrot.lane.b32.xlu0 %v994, 96
        %v1006 = vpop.permute.xlu0 %1005
        %v1011 = vsel %vm467, %v1000, 0.0
        %1012 = vadd.xlane.f32.xlu0 %v1011
        %v1013 = vpop.xlane.xlu0 %1012
        %v1014 = vsel %vm467, %v1002, 0.0
        %1015 = vadd.xlane.f32.xlu0 %v1014
        %v1016 = vpop.xlane.xlu0 %1015
        %v1017 = vsel %vm467, %v1004, 0.0
        %1018 = vadd.xlane.f32.xlu0 %v1017
        %v1019 = vpop.xlane.xlu0 %1018
        %v1020 = vsel %vm467, %v1006, 0.0
        %1021 = vadd.xlane.f32.xlu0 %v1020
        %v1022 = vpop.xlane.xlu0 %1021
        %v1023 = vmul.f32 %v1013, %v535
        %v1024 = vmul.f32 %v1016, %v535
        %v1025 = vmul.f32 %v1019, %v535
        %v1026 = vmul.f32 %v1022, %v535
        %v1027 = vadd.f32 %v1023, 1e-05
        %v1028 = vadd.f32 %v1024, 1e-05
        %v1029 = vadd.f32 %v1025, 1e-05
        %v1030 = vadd.f32 %v1026, 1e-05
        %v1031 = vrsqrt.pop %v1027
        %v1032 = vrsqrt.pop %v1028
        %v1033 = vrsqrt.pop %v1029
        %v1034 = vrsqrt.pop %v1030
        %v1035 = vmul.f32 %v987, %v1031
        %v1036 = vmul.f32 %v988, %v1032
        %v1037 = vmul.f32 %v989, %v1033
        %v1038 = vmul.f32 %v990, %v1034
        %v1039 = vlaneseq
        %v1040 = vshrl.u32 %v1039, 7
        %v1041 = vsub.s32 0, %v1040
        %v1042 = vrot.slane %v367, %v1041
        %1044 = vrot.lane.b32.xlu0 %v1042, 32
        %v1045 = vpop.permute.xlu0 %1044
        %v1047 = vmul.f32 %v1035, %v1045
        %v1048 = vmul.f32 %v1036, %v1045
        %v1049 = vmul.f32 %v1037, %v1045
        %v1050 = vmul.f32 %v1038, %v1045
        %v1051 = vlaneseq
        %v1052 = vshrl.u32 %v1051, 7
        %v1053 = vsub.s32 0, %v1052
        %v1054 = vrot.slane %v368, %v1053
        %1056 = vrot.lane.b32.xlu0 %v1054, 32
        %v1057 = vpop.permute.xlu0 %1056
        %v1059 = vadd.f32 %v1047, %v1057
        %v1060 = vadd.f32 %v1048, %v1057
        %v1061 = vadd.f32 %v1049, %v1057
        %v1062 = vadd.f32 %v1050, %v1057
        %v1063 = vsub.f32 0.0, %v939
        %v1064 = vsub.f32 0.0, %v940
        %v1065 = vsub.f32 0.0, %v941
        %v1066 = vsub.f32 0.0, %v942
        %v1067 = vmul.f32 %v1063, 1.442695
        %v1068 = vpow.pop %v1067
        %v1069 = vmul.f32 %v1064, 1.442695
        %v1070 = vpow.pop %v1069
        %v1071 = vmul.f32 %v1065, 1.442695
        %v1072 = vpow.pop %v1071
        %v1073 = vmul.f32 %v1066, 1.442695
        %v1074 = vpow.pop %v1073
        %v1075 = vadd.f32 %v1068, 1.0
        %v1076 = vadd.f32 %v1070, 1.0
        %v1077 = vadd.f32 %v1072, 1.0
        %v1078 = vadd.f32 %v1074, 1.0
        %v1079 = vrcp.pop %v1075
        %v1080 = vrcp.pop %v1076
        %v1081 = vrcp.pop %v1077
        %v1082 = vrcp.pop %v1078
        %1087 = vrot.lane.b32.xlu0 %v1059, 96
        %v1088 = vpop.permute.xlu0 %1087
        %1089 = vrot.lane.b32.xlu0 %v1060, 96
        %v1090 = vpop.permute.xlu0 %1089
        %1091 = vrot.lane.b32.xlu0 %v1061, 96
        %v1092 = vpop.permute.xlu0 %1091
        %1093 = vrot.lane.b32.xlu0 %v1062, 96
        %v1094 = vpop.permute.xlu0 %1093
        %v1099 = vmul.f32 %v1079, %v1088
        %v1100 = vmul.f32 %v1080, %v1090
        %v1101 = vmul.f32 %v1081, %v1092
        %v1102 = vmul.f32 %v1082, %v1094
        %v1103 = vsub.f32 1.0, %v1079
        %v1104 = vsub.f32 1.0, %v1080
        %v1105 = vsub.f32 1.0, %v1081
        %v1106 = vsub.f32 1.0, %v1082
        %v1107 = vmul.f32 %v1103, %v588
        %v1108 = vmul.f32 %v1104, %v589
        %v1109 = vmul.f32 %v1105, %v590
        %v1110 = vmul.f32 %v1106, %v591
        %v1111 = vadd.f32 %v1099, %v1107
        %v1112 = vadd.f32 %v1100, %v1108
        %v1113 = vadd.f32 %v1101, %v1109
        %v1114 = vadd.f32 %v1102, %v1110
        %v1115 = vpack.c.bf16 %v1112, %v1111
        %v1116 = vpack.c.bf16 %v1114, %v1113
        %v1117 = vld [vmem:[%s3] sm:$0xf]
        %v1118 = vld [vmem:[%s3 + $0x4] sm:$0xf]
        %v1119 = vld [vmem:[%s3 + $0x8] sm:$0xf]
        %v1120 = vld [vmem:[%s3 + $0xc] sm:$0xf]
        %v1121 = vlaneseq
        %v1122 = vshrl.u32 %v1121, 7
        %v1123 = vsub.s32 0, %v1122
        %v1124 = vrot.slane %v369, %v1123
        %v1129 = vunpack.c.l.b16 %v1117
        %v1130 = vunpack.c.l.b16 %v1118
        %v1131 = vunpack.c.l.b16 %v1119
        %v1132 = vunpack.c.l.b16 %v1120
        %v1133 = vpack.c.b16 %v1130, %v1129
        %v1134 = vpack.c.b16 %v1132, %v1131
        %v1138 = vsel %vm467, %v1115, 0
        %v1141 = vsel %vm467, %v1116, 0
        %1143 = vmatprep.subr.bf16.mxu0 0
        %1144 = vmatpush1.bf16.msra.mxu0 %v1133
        %1145 = vmatprep.subr.bf16.mxu0 0
        %1146 = vmatpush1.bf16.msra.mxu0 %v1134
        %1147 = vmatprep.subr.bf16.mxu0 0
        %1148 = vmatpush1.bf16.msra.mxu0 0
        %1149 = vmatprep.subr.bf16.mxu0 0
        %1150 = vmatpush1.bf16.msra.mxu0 0
        %1151 = vmatprep.subr.bf16.mxu0 0
        %1152 = vmatpush1.bf16.msra.mxu0 0
        %1153 = vmatprep.subr.bf16.mxu0 0
        %1154 = vmatpush1.bf16.msra.mxu0 0
        %1155 = vmatprep.subr.bf16.mxu0 0
        %1156 = vmatpush1.bf16.msra.mxu0 0
        %1157 = vmatprep.subr.bf16.mxu0 0
        %1158 = vmatpush1.bf16.msra.mxu0 0
        %1159 = vmatprep.subr.bf16.mxu0 0
        %1160 = vmatpush1.bf16.msra.mxu0 0
        %1161 = vmatprep.subr.bf16.mxu0 0
        %1162 = vmatpush1.bf16.msra.mxu0 0
        %1163 = vmatprep.subr.bf16.mxu0 0
        %1164 = vmatpush1.bf16.msra.mxu0 0
        %1165 = vmatprep.subr.bf16.mxu0 0
        %1166 = vmatpush1.bf16.msra.mxu0 0
        %1167 = vmatprep.subr.bf16.mxu0 0
        %1168 = vmatpush1.bf16.msra.mxu0 0
        %1169 = vmatprep.subr.bf16.mxu0 0
        %1170 = vmatpush1.bf16.msra.mxu0 0
        %1171 = vmatprep.subr.bf16.mxu0 0
        %1172 = vmatpush1.bf16.msra.mxu0 0
        %1173 = vmatprep.subr.bf16.mxu0 0
        %1174 = vmatpush1.bf16.msra.mxu0 0
        %1175 = vmatprep.mubr.bf16.mxu0 0
        %1176 = vmatmul.mubr.bf16.gmra.mrb[0].mxu0 %v1138
        %v1177 = vpop.f32.mrb[0].mxu0
        %v1178 = vadd.f32 %v1124, %v1177
        %v1179 = vpop.f32.mrb[0].mxu0
        %v1180 = vpop.f32.mrb[0].mxu0
        %v1181 = vadd.f32 %v1124, %v1180
        %v1182 = vpop.f32.mrb[0].mxu0
        %1183 = vmatprep.mubr.bf16.mxu0 0
        %1184 = vmatmul.mubr.bf16.gmra.mrb[0].mxu0 %v1141
        %v1185 = vpop.f32.mrb[0].mxu0
        %v1186 = vadd.f32 %v1124, %v1185
        %v1187 = vpop.f32.mrb[0].mxu0
        %v1188 = vpop.f32.mrb[0].mxu0
        %v1189 = vadd.f32 %v1124, %v1188
        %v1190 = vpop.f32.mrb[0].mxu0
        %1191 = vdwg.mxu0
        %v1192 = vrot.slane %v1178, 1
        %v1193 = vrot.slane %v1181, 1
        %v1194 = vrot.slane %v1186, 1
        %v1195 = vrot.slane %v1189, 1
        %v1196 = vsel %vm629, %v1194, %v1195
        %v1197 = vsel %vm629, %v1193, %v1194
        %v1198 = vsel %vm629, %v1192, %v1193
        %v1199 = vsel %vm629, %v1195, %v1192
        %v1200 = vrot.slane %v1178, 7
        %v1201 = vrot.slane %v1181, 7
        %v1202 = vrot.slane %v1186, 7
        %v1203 = vrot.slane %v1189, 7
        %v1204 = vsel %vm600, %v1202, %v1203
        %v1205 = vsel %vm600, %v1201, %v1202
        %v1206 = vsel %vm600, %v1200, %v1201
        %v1207 = vsel %vm600, %v1203, %v1200
        %vm1208 = vcmp.lt.s32.totalorder %v385, 0
        %v1209 = vsub.s32 0, %v385
        %v1210 = vsel %vm1208, %v1209, %v385
        %v1211 = vshrl.u32 %v1210, 1
        %v1212 = vand.u32 %v1210, 1
        %v1213 = vsub.s32 0, %v1212
        %v1214 = vsel %vm1208, %v1213, %v1212
        %vm1215 = vcmp.lt.s32.totalorder %v386, 0
        %v1216 = vsub.s32 0, %v386
        %v1217 = vsel %vm1215, %v1216, %v386
        %v1218 = vshrl.u32 %v1217, 1
        %v1219 = vand.u32 %v1217, 1
        %v1220 = vsub.s32 0, %v1219
        %v1221 = vsel %vm1215, %v1220, %v1219
        %vm1222 = vcmp.lt.s32.totalorder %v387, 0
        %v1223 = vsub.s32 0, %v387
        %v1224 = vsel %vm1222, %v1223, %v387
        %v1225 = vshrl.u32 %v1224, 1
        %v1226 = vand.u32 %v1224, 1
        %v1227 = vsub.s32 0, %v1226
        %v1228 = vsel %vm1222, %v1227, %v1226
        %vm1229 = vcmp.lt.s32.totalorder %v388, 0
        %v1230 = vsub.s32 0, %v388
        %v1231 = vsel %vm1229, %v1230, %v388
        %v1232 = vshrl.u32 %v1231, 1
        %v1233 = vand.u32 %v1231, 1
        %v1234 = vsub.s32 0, %v1233
        %v1235 = vsel %vm1229, %v1234, %v1233
        %vm1236 = vcmp.ne.s32.totalorder %v1214, 0
        %vm1237 = vcmp.ne.s32.totalorder %v1221, 0
        %vm1238 = vcmp.ne.s32.totalorder %v1228, 0
        %vm1239 = vcmp.ne.s32.totalorder %v1235, 0
        %vm1240 = vcmp.lt.s32.totalorder %v1214, 0
        %vm1241 = vcmp.lt.s32.totalorder %v1221, 0
        %vm1242 = vcmp.lt.s32.totalorder %v1228, 0
        %vm1243 = vcmp.lt.s32.totalorder %v1235, 0
        %vm1244 = vmand %vm1240, %vm1236
        %vm1245 = vmand %vm1241, %vm1237
        %vm1246 = vmand %vm1242, %vm1238
        %vm1247 = vmand %vm1243, %vm1239
        %v1248 = vadd.s32 %v1214, 2
        %v1249 = vadd.s32 %v1221, 2
        %v1250 = vadd.s32 %v1228, 2
        %v1251 = vadd.s32 %v1235, 2
        %v1252 = vsel %vm1244, %v1248, %v1214
        %v1253 = vsel %vm1245, %v1249, %v1221
        %v1254 = vsel %vm1246, %v1250, %v1228
        %v1255 = vsel %vm1247, %v1251, %v1235
        %vm1256 = vcmp.eq.s32.totalorder %v1252, 0
        %vm1257 = vcmp.eq.s32.totalorder %v1253, 0
        %vm1258 = vcmp.eq.s32.totalorder %v1254, 0
        %vm1259 = vcmp.eq.s32.totalorder %v1255, 0
        %v1260 = vsel %vm1256, 1, 0
        %v1261 = vsel %vm1257, 1, 0
        %v1262 = vsel %vm1258, 1, 0
        %v1263 = vsel %vm1259, 1, 0
        %vm1264 = vcmp.eq.s32.totalorder %v1260, 1
        %vm1265 = vcmp.eq.s32.totalorder %v1261, 1
        %vm1266 = vcmp.eq.s32.totalorder %v1262, 1
        %vm1267 = vcmp.eq.s32.totalorder %v1263, 1
        %v1268 = vsel %vm1264, %v1198, %v1207
        %v1269 = vsel %vm1265, %v1197, %v1206
        %v1270 = vsel %vm1266, %v1196, %v1205
        %v1271 = vsel %vm1267, %v1199, %v1204
        %v1272 = vadd.f32 %v1178, %v1268
        %v1273 = vadd.f32 %v1181, %v1269
        %v1274 = vadd.f32 %v1186, %v1270
        %v1275 = vadd.f32 %v1189, %v1271
        %v1276 = vmul.f32 %v1272, 0.5
        %v1277 = vmul.f32 %v1273, 0.5
        %v1278 = vmul.f32 %v1274, 0.5
        %v1279 = vmul.f32 %v1275, 0.5
        %vm1280 = vcmask 523264
        %v1281 = vsel %vm1280, %v1276, 0.0
        %1282 = vadd.xlane.f32.xlu0 %v1281
        %v1283 = vpop.xlane.xlu0 %1282
        %v1284 = vsel %vm1280, %v1277, 0.0
        %1285 = vadd.xlane.f32.xlu0 %v1284
        %v1286 = vpop.xlane.xlu0 %1285
        %v1287 = vsel %vm1280, %v1278, 0.0
        %1288 = vadd.xlane.f32.xlu0 %v1287
        %v1289 = vpop.xlane.xlu0 %1288
        %v1290 = vsel %vm1280, %v1279, 0.0
        %1291 = vadd.xlane.f32.xlu0 %v1290
        %v1292 = vpop.xlane.xlu0 %1291
        %v1293 = vrcp.pop 64.0
        %v1294 = vmul.f32 %v1283, %v1293
        %v1295 = vmul.f32 %v1286, %v1293
        %v1296 = vmul.f32 %v1289, %v1293
        %v1297 = vmul.f32 %v1292, %v1293
        %v1298 = vsub.f32 %v1276, %v1294
        %v1299 = vsub.f32 %v1277, %v1295
        %v1300 = vsub.f32 %v1278, %v1296
        %v1301 = vsub.f32 %v1279, %v1297
        %v1302 = vmul.f32 %v1298, %v1298
        %v1303 = vmul.f32 %v1299, %v1299
        %v1304 = vmul.f32 %v1300, %v1300
        %v1305 = vmul.f32 %v1301, %v1301
        %v1306 = vsel %vm1280, %v1302, 0.0
        %1307 = vadd.xlane.f32.xlu0 %v1306
        %v1308 = vpop.xlane.xlu0 %1307
        %v1309 = vsel %vm1280, %v1303, 0.0
        %1310 = vadd.xlane.f32.xlu0 %v1309
        %v1311 = vpop.xlane.xlu0 %1310
        %v1312 = vsel %vm1280, %v1304, 0.0
        %1313 = vadd.xlane.f32.xlu0 %v1312
        %v1314 = vpop.xlane.xlu0 %1313
        %v1315 = vsel %vm1280, %v1305, 0.0
        %1316 = vadd.xlane.f32.xlu0 %v1315
        %v1317 = vpop.xlane.xlu0 %1316
        %v1318 = vmul.f32 %v1308, %v1293
        %v1319 = vmul.f32 %v1311, %v1293
        %v1320 = vmul.f32 %v1314, %v1293
        %v1321 = vmul.f32 %v1317, %v1293
        %v1322 = vadd.f32 %v1318, 1e-05
        %v1323 = vadd.f32 %v1319, 1e-05
        %v1324 = vadd.f32 %v1320, 1e-05
        %v1325 = vadd.f32 %v1321, 1e-05
        %v1326 = vrsqrt.pop %v1322
        %v1327 = vrsqrt.pop %v1323
        %v1328 = vrsqrt.pop %v1324
        %v1329 = vrsqrt.pop %v1325
        %v1330 = vmul.f32 %v1298, %v1326
        %v1331 = vmul.f32 %v1299, %v1327
        %v1332 = vmul.f32 %v1300, %v1328
        %v1333 = vmul.f32 %v1301, %v1329
        %v1334 = vlaneseq
        %v1335 = vshrl.u32 %v1334, 7
        %v1336 = vsub.s32 0, %v1335
        %v1337 = vrot.slane %v370, %v1336
        %v1338 = vmul.f32 %v1330, %v1337
        %v1339 = vmul.f32 %v1331, %v1337
        %v1340 = vmul.f32 %v1332, %v1337
        %v1341 = vmul.f32 %v1333, %v1337
        %v1342 = vlaneseq
        %v1343 = vshrl.u32 %v1342, 7
        %v1344 = vsub.s32 0, %v1343
        %v1345 = vrot.slane %v371, %v1344
        %v1346 = vadd.f32 %v1338, %v1345
        %v1347 = vadd.f32 %v1339, %v1345
        %v1348 = vadd.f32 %v1340, %v1345
        %v1349 = vadd.f32 %v1341, %v1345
        %v1350 = vmul.f32 %v1346, 0.05
        %v1351 = vmul.f32 %v1347, 0.05
        %v1352 = vmul.f32 %v1348, 0.05
        %v1353 = vmul.f32 %v1349, 0.05
        %v1354 = vmax.f32 %v1346, %v1350
        %v1355 = vmax.f32 %v1347, %v1351
        %v1356 = vmax.f32 %v1348, %v1352
        %v1357 = vmax.f32 %v1349, %v1353
        %v1358 = vpack.c.bf16 %v1355, %v1354
        %v1359 = vpack.c.bf16 %v1357, %v1356
        %v1360 = vld [vmem:[%s4] sm:$0xf]
        %v1361 = vld [vmem:[%s4 + $0x4] sm:$0xf]
        %v1362 = vld [vmem:[%s4 + $0x8] sm:$0xf]
        %v1363 = vld [vmem:[%s4 + $0xc] sm:$0xf]
        %v1364 = vld [vmem:[%s4 + $0x10] sm:$0xf]
        %v1365 = vld [vmem:[%s4 + $0x14] sm:$0xf]
        %v1366 = vld [vmem:[%s4 + $0x18] sm:$0xf]
        %v1367 = vld [vmem:[%s4 + $0x1c] sm:$0xf]
        %v1368 = vlaneseq
        %v1369 = vshrl.u32 %v1368, 7
        %v1370 = vsub.s32 0, %v1369
        %v1371 = vrot.slane %v372, %v1370
        %v1380 = vunpack.c.l.b16 %v1360
        %v1381 = vunpack.c.l.b16 %v1361
        %v1382 = vunpack.c.l.b16 %v1362
        %v1383 = vunpack.c.l.b16 %v1363
        %v1384 = vunpack.c.l.b16 %v1364
        %v1385 = vunpack.c.l.b16 %v1365
        %v1386 = vunpack.c.l.b16 %v1366
        %v1387 = vunpack.c.l.b16 %v1367
        %v1388 = vpack.c.b16 %v1381, %v1380
        %v1389 = vpack.c.b16 %v1383, %v1382
        %v1390 = vpack.c.b16 %v1385, %v1384
        %v1391 = vpack.c.b16 %v1387, %v1386
        %v1397 = vsel %vm1280, %v1358, 0
        %v1400 = vsel %vm1280, %v1359, 0
        %1402 = vmatprep.subr.bf16.mxu0 0
        %1403 = vmatpush1.bf16.msra.mxu0 %v1388
        %1404 = vmatprep.subr.bf16.mxu0 0
        %1405 = vmatpush1.bf16.msra.mxu0 %v1389
        %1406 = vmatprep.subr.bf16.mxu0 0
        %1407 = vmatpush1.bf16.msra.mxu0 %v1390
        %1408 = vmatprep.subr.bf16.mxu0 0
        %1409 = vmatpush1.bf16.msra.mxu0 %v1391
        %1410 = vmatprep.subr.bf16.mxu0 0
        %1411 = vmatpush1.bf16.msra.mxu0 0
        %1412 = vmatprep.subr.bf16.mxu0 0
        %1413 = vmatpush1.bf16.msra.mxu0 0
        %1414 = vmatprep.subr.bf16.mxu0 0
        %1415 = vmatpush1.bf16.msra.mxu0 0
        %1416 = vmatprep.subr.bf16.mxu0 0
        %1417 = vmatpush1.bf16.msra.mxu0 0
        %1418 = vmatprep.subr.bf16.mxu0 0
        %1419 = vmatpush1.bf16.msra.mxu0 0
        %1420 = vmatprep.subr.bf16.mxu0 0
        %1421 = vmatpush1.bf16.msra.mxu0 0
        %1422 = vmatprep.subr.bf16.mxu0 0
        %1423 = vmatpush1.bf16.msra.mxu0 0
        %1424 = vmatprep.subr.bf16.mxu0 0
        %1425 = vmatpush1.bf16.msra.mxu0 0
        %1426 = vmatprep.subr.bf16.mxu0 0
        %1427 = vmatpush1.bf16.msra.mxu0 0
        %1428 = vmatprep.subr.bf16.mxu0 0
        %1429 = vmatpush1.bf16.msra.mxu0 0
        %1430 = vmatprep.subr.bf16.mxu0 0
        %1431 = vmatpush1.bf16.msra.mxu0 0
        %1432 = vmatprep.subr.bf16.mxu0 0
        %1433 = vmatpush1.bf16.msra.mxu0 0
        %1434 = vmatprep.mubr.bf16.mxu0 0
        %1435 = vmatmul.mubr.bf16.gmra.mrb[0].mxu0 %v1397
        %v1436 = vpop.f32.mrb[0].mxu0
        %v1437 = vadd.f32 %v1371, %v1436
        %v1438 = vpop.f32.mrb[0].mxu0
        %v1439 = vpop.f32.mrb[0].mxu0
        %v1440 = vadd.f32 %v1371, %v1439
        %v1441 = vpop.f32.mrb[0].mxu0
        %1442 = vmatprep.mubr.bf16.mxu0 0
        %1443 = vmatmul.mubr.bf16.gmra.mrb[0].mxu0 %v1400
        %v1444 = vpop.f32.mrb[0].mxu0
        %v1445 = vadd.f32 %v1371, %v1444
        %v1446 = vpop.f32.mrb[0].mxu0
        %v1447 = vpop.f32.mrb[0].mxu0
        %v1448 = vadd.f32 %v1371, %v1447
        %v1449 = vpop.f32.mrb[0].mxu0
        %1450 = vdwg.mxu0
        %vm1451 = vcmask 130048
        %v1452 = vsel %vm1451, %v1437, 0.0
        %1453 = vadd.xlane.f32.xlu0 %v1452
        %v1454 = vpop.xlane.xlu0 %1453
        %v1455 = vsel %vm1451, %v1440, 0.0
        %1456 = vadd.xlane.f32.xlu0 %v1455
        %v1457 = vpop.xlane.xlu0 %1456
        %v1458 = vsel %vm1451, %v1445, 0.0
        %1459 = vadd.xlane.f32.xlu0 %v1458
        %v1460 = vpop.xlane.xlu0 %1459
        %v1461 = vsel %vm1451, %v1448, 0.0
        %1462 = vadd.xlane.f32.xlu0 %v1461
        %v1463 = vpop.xlane.xlu0 %1462
        %v1464 = vrcp.pop 16.0
        %v1465 = vmul.f32 %v1454, %v1464
        %v1466 = vmul.f32 %v1457, %v1464
        %v1467 = vmul.f32 %v1460, %v1464
        %v1468 = vmul.f32 %v1463, %v1464
        %v1469 = vsub.f32 %v1437, %v1465
        %v1470 = vsub.f32 %v1440, %v1466
        %v1471 = vsub.f32 %v1445, %v1467
        %v1472 = vsub.f32 %v1448, %v1468
        %v1473 = vmul.f32 %v1469, %v1469
        %v1474 = vmul.f32 %v1470, %v1470
        %v1475 = vmul.f32 %v1471, %v1471
        %v1476 = vmul.f32 %v1472, %v1472
        %v1477 = vsel %vm1451, %v1473, 0.0
        %1478 = vadd.xlane.f32.xlu0 %v1477
        %v1479 = vpop.xlane.xlu0 %1478
        %v1480 = vsel %vm1451, %v1474, 0.0
        %1481 = vadd.xlane.f32.xlu0 %v1480
        %v1482 = vpop.xlane.xlu0 %1481
        %v1483 = vsel %vm1451, %v1475, 0.0
        %1484 = vadd.xlane.f32.xlu0 %v1483
        %v1485 = vpop.xlane.xlu0 %1484
        %v1486 = vsel %vm1451, %v1476, 0.0
        %1487 = vadd.xlane.f32.xlu0 %v1486
        %v1488 = vpop.xlane.xlu0 %1487
        %v1489 = vmul.f32 %v1479, %v1464
        %v1490 = vmul.f32 %v1482, %v1464
        %v1491 = vmul.f32 %v1485, %v1464
        %v1492 = vmul.f32 %v1488, %v1464
        %v1493 = vadd.f32 %v1489, 1e-05
        %v1494 = vadd.f32 %v1490, 1e-05
        %v1495 = vadd.f32 %v1491, 1e-05
        %v1496 = vadd.f32 %v1492, 1e-05
        %v1497 = vrsqrt.pop %v1493
        %v1498 = vrsqrt.pop %v1494
        %v1499 = vrsqrt.pop %v1495
        %v1500 = vrsqrt.pop %v1496
        %v1501 = vmul.f32 %v1469, %v1497
        %v1502 = vmul.f32 %v1470, %v1498
        %v1503 = vmul.f32 %v1471, %v1499
        %v1504 = vmul.f32 %v1472, %v1500
        %v1505 = vlaneseq
        %v1506 = vshrl.u32 %v1505, 7
        %v1507 = vsub.s32 0, %v1506
        %v1508 = vrot.slane %v373, %v1507
        %v1509 = vmul.f32 %v1501, %v1508
        %v1510 = vmul.f32 %v1502, %v1508
        %v1511 = vmul.f32 %v1503, %v1508
        %v1512 = vmul.f32 %v1504, %v1508
        %v1513 = vlaneseq
        %v1514 = vshrl.u32 %v1513, 7
        %v1515 = vsub.s32 0, %v1514
        %v1516 = vrot.slane %v374, %v1515
        %v1517 = vadd.f32 %v1509, %v1516
        %v1518 = vadd.f32 %v1510, %v1516
        %v1519 = vadd.f32 %v1511, %v1516
        %v1520 = vadd.f32 %v1512, %v1516
        %v1521 = vmul.f32 %v1517, 0.05
        %v1522 = vmul.f32 %v1518, 0.05
        %v1523 = vmul.f32 %v1519, 0.05
        %v1524 = vmul.f32 %v1520, 0.05
        %v1525 = vmax.f32 %v1517, %v1521
        %v1526 = vmax.f32 %v1518, %v1522
        %v1527 = vmax.f32 %v1519, %v1523
        %v1528 = vmax.f32 %v1520, %v1524
        %v1529 = vpack.c.bf16 %v1526, %v1525
        %v1530 = vpack.c.bf16 %v1528, %v1527
        %v1531 = vld [vmem:[%s5] sm:$0xf]
        %v1532 = vld [vmem:[%s5 + $0x4] sm:$0xf]
        %v1533 = vlaneseq
        %v1534 = vshrl.u32 %v1533, 7
        %v1535 = vsub.s32 0, %v1534
        %v1536 = vrot.slane %v375, %v1535
        %v1539 = vunpack.c.l.b16 %v1531
        %v1540 = vunpack.c.l.b16 %v1532
        %v1541 = vpack.c.b16 %v1540, %v1539
        %v1544 = vsel %vm1451, %v1529, 0
        %v1547 = vsel %vm1451, %v1530, 0
        %1549 = vmatprep.subr.bf16.mxu0 0
        %1550 = vmatpush1.bf16.msra.mxu0 %v1541
        %1551 = vmatprep.subr.bf16.mxu0 0
        %1552 = vmatpush1.bf16.msra.mxu0 0
        %1553 = vmatprep.subr.bf16.mxu0 0
        %1554 = vmatpush1.bf16.msra.mxu0 0
        %1555 = vmatprep.subr.bf16.mxu0 0
        %1556 = vmatpush1.bf16.msra.mxu0 0
        %1557 = vmatprep.subr.bf16.mxu0 0
        %1558 = vmatpush1.bf16.msra.mxu0 0
        %1559 = vmatprep.subr.bf16.mxu0 0
        %1560 = vmatpush1.bf16.msra.mxu0 0
        %1561 = vmatprep.subr.bf16.mxu0 0
        %1562 = vmatpush1.bf16.msra.mxu0 0
        %1563 = vmatprep.subr.bf16.mxu0 0
        %1564 = vmatpush1.bf16.msra.mxu0 0
        %1565 = vmatprep.subr.bf16.mxu0 0
        %1566 = vmatpush1.bf16.msra.mxu0 0
        %1567 = vmatprep.subr.bf16.mxu0 0
        %1568 = vmatpush1.bf16.msra.mxu0 0
        %1569 = vmatprep.subr.bf16.mxu0 0
        %1570 = vmatpush1.bf16.msra.mxu0 0
        %1571 = vmatprep.subr.bf16.mxu0 0
        %1572 = vmatpush1.bf16.msra.mxu0 0
        %1573 = vmatprep.subr.bf16.mxu0 0
        %1574 = vmatpush1.bf16.msra.mxu0 0
        %1575 = vmatprep.subr.bf16.mxu0 0
        %1576 = vmatpush1.bf16.msra.mxu0 0
        %1577 = vmatprep.subr.bf16.mxu0 0
        %1578 = vmatpush1.bf16.msra.mxu0 0
        %1579 = vmatprep.subr.bf16.mxu0 0
        %1580 = vmatpush1.bf16.msra.mxu0 0
        %1581 = vmatprep.mubr.bf16.mxu0 0
        %1582 = vmatmul.mubr.bf16.gmra.mrb[0].mxu0 %v1544
        %v1583 = vpop.f32.mrb[0].mxu0
        %v1584 = vadd.f32 %v1536, %v1583
        %v1585 = vpop.f32.mrb[0].mxu0
        %v1586 = vpop.f32.mrb[0].mxu0
        %v1587 = vadd.f32 %v1536, %v1586
        %v1588 = vpop.f32.mrb[0].mxu0
        %1589 = vmatprep.mubr.bf16.mxu0 0
        %1590 = vmatmul.mubr.bf16.gmra.mrb[0].mxu0 %v1547
        %v1591 = vpop.f32.mrb[0].mxu0
        %v1592 = vadd.f32 %v1536, %v1591
        %v1593 = vpop.f32.mrb[0].mxu0
        %v1594 = vpop.f32.mrb[0].mxu0
        %v1595 = vadd.f32 %v1536, %v1594
        %v1596 = vpop.f32.mrb[0].mxu0
        %1597 = vdwg.mxu0
        %vm1598 = vcmask 31744
        %v1599 = vsel %vm1598, %v1584, 0.0
        %1600 = vadd.xlane.f32.xlu0 %v1599
        %v1601 = vpop.xlane.xlu0 %1600
        %v1602 = vsel %vm1598, %v1587, 0.0
        %1603 = vadd.xlane.f32.xlu0 %v1602
        %v1604 = vpop.xlane.xlu0 %1603
        %v1605 = vsel %vm1598, %v1592, 0.0
        %1606 = vadd.xlane.f32.xlu0 %v1605
        %v1607 = vpop.xlane.xlu0 %1606
        %v1608 = vsel %vm1598, %v1595, 0.0
        %1609 = vadd.xlane.f32.xlu0 %v1608
        %v1610 = vpop.xlane.xlu0 %1609
        %v1611 = vrcp.pop 4.0
        %v1612 = vmul.f32 %v1601, %v1611
        %v1613 = vmul.f32 %v1604, %v1611
        %v1614 = vmul.f32 %v1607, %v1611
        %v1615 = vmul.f32 %v1610, %v1611
        %v1616 = vsub.f32 %v1584, %v1612
        %v1617 = vsub.f32 %v1587, %v1613
        %v1618 = vsub.f32 %v1592, %v1614
        %v1619 = vsub.f32 %v1595, %v1615
        %v1620 = vmul.f32 %v1616, %v1616
        %v1621 = vmul.f32 %v1617, %v1617
        %v1622 = vmul.f32 %v1618, %v1618
        %v1623 = vmul.f32 %v1619, %v1619
        %v1624 = vsel %vm1598, %v1620, 0.0
        %1625 = vadd.xlane.f32.xlu0 %v1624
        %v1626 = vpop.xlane.xlu0 %1625
        %v1627 = vsel %vm1598, %v1621, 0.0
        %1628 = vadd.xlane.f32.xlu0 %v1627
        %v1629 = vpop.xlane.xlu0 %1628
        %v1630 = vsel %vm1598, %v1622, 0.0
        %1631 = vadd.xlane.f32.xlu0 %v1630
        %v1632 = vpop.xlane.xlu0 %1631
        %v1633 = vsel %vm1598, %v1623, 0.0
        %1634 = vadd.xlane.f32.xlu0 %v1633
        %v1635 = vpop.xlane.xlu0 %1634
        %v1636 = vmul.f32 %v1626, %v1611
        %v1637 = vmul.f32 %v1629, %v1611
        %v1638 = vmul.f32 %v1632, %v1611
        %v1639 = vmul.f32 %v1635, %v1611
        %v1640 = vadd.f32 %v1636, 1e-05
        %v1641 = vadd.f32 %v1637, 1e-05
        %v1642 = vadd.f32 %v1638, 1e-05
        %v1643 = vadd.f32 %v1639, 1e-05
        %v1644 = vrsqrt.pop %v1640
        %v1645 = vrsqrt.pop %v1641
        %v1646 = vrsqrt.pop %v1642
        %v1647 = vrsqrt.pop %v1643
        %v1648 = vmul.f32 %v1616, %v1644
        %v1649 = vmul.f32 %v1617, %v1645
        %v1650 = vmul.f32 %v1618, %v1646
        %v1651 = vmul.f32 %v1619, %v1647
        %v1652 = vlaneseq
        %v1653 = vshrl.u32 %v1652, 7
        %v1654 = vsub.s32 0, %v1653
        %v1655 = vrot.slane %v376, %v1654
        %v1656 = vmul.f32 %v1648, %v1655
        %v1657 = vmul.f32 %v1649, %v1655
        %v1658 = vmul.f32 %v1650, %v1655
        %v1659 = vmul.f32 %v1651, %v1655
        %v1660 = vlaneseq
        %v1661 = vshrl.u32 %v1660, 7
        %v1662 = vsub.s32 0, %v1661
        %v1663 = vrot.slane %v377, %v1662
        %v1664 = vadd.f32 %v1656, %v1663
        %v1665 = vadd.f32 %v1657, %v1663
        %v1666 = vadd.f32 %v1658, %v1663
        %v1667 = vadd.f32 %v1659, %v1663
        %v1668 = vmul.f32 %v1664, 0.05
        %v1669 = vmul.f32 %v1665, 0.05
        %v1670 = vmul.f32 %v1666, 0.05
        %v1671 = vmul.f32 %v1667, 0.05
        %v1672 = vmax.f32 %v1664, %v1668
        %v1673 = vmax.f32 %v1665, %v1669
        %v1674 = vmax.f32 %v1666, %v1670
        %v1675 = vmax.f32 %v1667, %v1671
        %v1676 = vlaneseq
        %v1677 = vshrl.u32 %v1676, 7
        %v1678 = vsub.s32 0, %v1677
        %v1679 = vrot.slane %v378, %v1678
        %v1680 = vmul.f32 %v1672, %v1679
        %v1681 = vmul.f32 %v1673, %v1679
        %v1682 = vmul.f32 %v1674, %v1679
        %v1683 = vmul.f32 %v1675, %v1679
        %v1684 = vsel %vm1598, %v1680, 0.0
        %1685 = vadd.xlane.f32.xlu0 %v1684
        %v1686 = vpop.xlane.xlu0 %1685
        %v1687 = vsel %vm1598, %v1681, 0.0
        %1688 = vadd.xlane.f32.xlu0 %v1687
        %v1689 = vpop.xlane.xlu0 %1688
        %v1690 = vsel %vm1598, %v1682, 0.0
        %1691 = vadd.xlane.f32.xlu0 %v1690
        %v1692 = vpop.xlane.xlu0 %1691
        %v1693 = vsel %vm1598, %v1683, 0.0
        %1694 = vadd.xlane.f32.xlu0 %v1693
        %v1695 = vpop.xlane.xlu0 %1694
        %v1696 = vadd.f32 %v1686, %v1689
        %v1697 = vrot.slane %v1696, 4
        %v1698 = vadd.f32 %v1696, %v1697
        %v1699 = vrot.slane %v1698, 2
        %v1700 = vadd.f32 %v1698, %v1699
        %v1701 = vrot.slane %v1700, 1
        %v1702 = vadd.f32 %v1700, %v1701
        %v1703 = vadd.f32 %v1692, %v1695
        %v1704 = vrot.slane %v1703, 4
        %v1705 = vadd.f32 %v1703, %v1704
        %v1706 = vrot.slane %v1705, 2
        %v1707 = vadd.f32 %v1705, %v1706
        %v1708 = vrot.slane %v1707, 1
        %v1709 = vadd.f32 %v1707, %v1708
        %vm1710 = vcmask 7168
        %v1711 = vsel %vm1710, %v1702, %v1709
        %v1712 = vmul.f32 %v1711, 0.0625
        %1714 = vset.pattern.permute.xlu0 0
        %1715 = vperm.xlu0 %1714, %v379
        %v1716 = vpop.permute.xlu0 %1715
        %v1718 = vadd.f32 %v1712, %v1716
        %v1719 = vsub.f32 0.0, %v1718
        %v1720 = vmul.f32 %v1719, 1.442695
        %v1721 = vpow.pop %v1720
        %v1722 = vadd.f32 %v1721, 1.0
        %v1723 = vrcp.pop %v1722
        %vm1724 = vcmask 8192
        %1725 = vst.msk [vmem:[%s352] sm:$0x1] %vm1724, %v1723
        %s1726 = sand.u32 %s247, 1
        %s1727 = scalar_lea.sflag [#allocation3], %s1726
        %s1728 = sand.u32 %s247, 1
        %s1729 = scalar_lea.vmem [#allocation2], %s1728
        // Predicated region
        $region61: #{tpu_custom_call.1} parent=59 // pred_check
          %p1730 = pneg %p257
        $region62: #{tpu_custom_call.1} parent=59 // pred_check_branch
          %1732 = sbr.rel (%p1730) target = $region64
        $region63: #{tpu_custom_call.1} parent=59 // pred_region
          %s1734 = ssub.s32 16, 16
          %1735 = vsyncadd %s1727, %s1734
          %s1736 = smul.addr %s24, 16
          %s1737 = scalar_lea.hbm %s10, %s1736
          %s1739 = sshll.u32 %s1729, 4
          %s1740 = int_to_ptr.vmem [resolvable:$true] %s1739
          %1742 = dma.vmem_to_hbm [thread:$0]  %s1740, 16, %s1737, %s1727
        $region64: #{tpu_custom_call.1} parent=59 // pred_fallthru
          _
      $region60: #{tpu_custom_call.1} parent=5 // pred_fallthru
        _
      %p1743 = scmp.le.s32.totalorder 2, %s19
      // Predicated region
      $region65: #{tpu_custom_call.1} parent=5 // pred_check
        %p1744 = pneg %p1743
      $region66: #{tpu_custom_call.1} parent=5 // pred_check_branch
        %1746 = sbr.rel (%p1744) target = $region68
      $region67: #{tpu_custom_call.1} parent=5 // pred_region
        %s1747 = ssub.s32 %s19, 2
        // Predicated region
        $region69: #{tpu_custom_call.1} parent=67 // pred_check
          %p1748 = pneg %p263
        $region70: #{tpu_custom_call.1} parent=67 // pred_check_branch
          %1750 = sbr.rel (%p1748) target = $region72
        $region71: #{tpu_custom_call.1} parent=67 // pred_region
          %s1751 = sand.u32 %s248, 1
          %s1752 = scalar_lea.sflag [#allocation3], %s1751
          %s1753 = sand.u32 %s248, 1
          %s1754 = scalar_lea.vmem [#allocation2], %s1753
          %1755 = dma.done %s1752, 16
        $region72: #{tpu_custom_call.1} parent=67 // pred_fallthru
          _
      $region68: #{tpu_custom_call.1} parent=5 // pred_fallthru
        _
    $region6: #{tpu_custom_call.1} parent=1 // loop_footer
      %s23 = sadd.s32 1, %s19
    $region7: #{tpu_custom_call.1} parent=1 // loop_footer_branch
      %18 = sbr.rel target = $region3
    $region8: #{tpu_custom_call.1} parent=1 // loop_exit
      _
    %1756 = vsyncpa [#allocation3], 1
    %s1757 = scalar_lea.sflag [#allocation3], 1
    %1758 = vsyncpa %s1757, 1

</llo_original>
